<compile_context>
chip_gen: v5e
topology: v5e:2x2
jax: 0.10.0
libtpu: 0.0.40
codegen_flags: <defaults>
</compile_context>

<pallas_src>
import functools

import jax
import jax.numpy as jnp
from jax import lax
from jax.experimental import pallas as pl
from jax.experimental.pallas import tpu as pltpu

SELU_ALPHA = 1.6732632423543772848170429916717
SELU_SCALE = 1.0507009873554804934193349852946


def _selu(h):
    return SELU_SCALE * jnp.where(h > 0, h, SELU_ALPHA * (jnp.exp(h) - 1.0))


def _deconfuse_kernel(x_ref, w1_ref, wbd_ref, tall_ref, gp_ref, pred_ref, z_ref,
                      *, S, C1, C2, B, L):
    """Fused DeConFuse forward.

    x_ref   : (S*C1, B*L)     f32  input; row (s,c1) = series s repeated C1 times
    w1_ref  : (S*C1, 3)       f32  conv1 taps, w1[(s,c1), k] = T1[s, c1, k]
    wbd_ref : (S*C2, 3*S*C1)  f32  block-diagonal conv2 weights
    tall_ref: (S*F, TA)       bf16 dictionary tile (grid axis 0 walks atoms)
    gp_ref  : (B, TA)         f32  gp1 transposed, atoms on lanes (lane-dense)
    pred_ref: (S*C2, B*L)     f32  conv2 outputs in native compute layout
    z_ref   : (B, S*C2*L)     f32  VMEM scratch, persists across grid steps
    """
    BL = B * L

    # Convolutions run once, on the first atom tile only; results persist in
    # VMEM scratch (z_ref) and in the resident pred_ref block.
    @pl.when(pl.program_id(0) == 0)
    def _():
        # l-position of each lane (lanes packed as (b, l), l minor).
        lane = lax.broadcasted_iota(jnp.int32, (S * C1, BL), 1)
        l_idx = lane % L
        left = l_idx == 0            # no x[l-1] at the left edge
        right = l_idx == L - 1       # no x[l+1] at the right edge

        def shift_m1(v):   # v[:, (b,l)] <- v[:, (b,l-1)], zero at l == 0
            return jnp.where(left, 0.0, pltpu.roll(v, shift=1, axis=1))

        def shift_p1(v):   # v[:, (b,l)] <- v[:, (b,l+1)], zero at l == L-1
            return jnp.where(right, 0.0, pltpu.roll(v, shift=BL - 1, axis=1))

        # conv1 (1 -> C1, k=3, pad=1) for all 5 series at once:
        # three lane-broadcast multiply-adds on a single (S*C1, B*L) plane.
        x = x_ref[...]
        h = (w1_ref[:, 0:1] * shift_m1(x)
             + w1_ref[:, 1:2] * x
             + w1_ref[:, 2:3] * shift_p1(x))
        h = _selu(h)

        # conv2 (C1 -> C2, k=3, pad=1) for all 5 series as ONE block-diagonal
        # MXU matmul: (S*C2, 3*S*C1) @ (3*S*C1, B*L).
        H = jnp.concatenate([shift_m1(h), h, shift_p1(h)], axis=0)
        Z = jnp.dot(wbd_ref[...], H, preferred_element_type=jnp.float32)

        # pred in native (s*C2+c2, b*L+l) layout; reordered cheaply in wrapper.
        pred_ref[...] = Z

        # Single stacked relayout to the lane-dense GEMM operand:
        #   z[b, s*C2*L + c2*L + l] = Z[s*C2 + c2, b*L + l]
        z_ref[...] = jnp.transpose(Z.reshape(S * C2, B, L),
                                   (1, 0, 2)).reshape(B, S * C2 * L)

    # Dictionary projection, one atom tile per grid step.  The bf16 tile is
    # widened to f32 (f32 x f32 MXU GEMM, f32 accumulation); its DMA is
    # double-buffered by the BlockSpec pipeline and overlaps previous tiles.
    gp_ref[...] = jnp.dot(z_ref[...], tall_ref[...].astype(jnp.float32),
                          preferred_element_type=jnp.float32)


def prepare_params(t1, t2, Tmat):
    """Parameter-only preprocessing, hoisted OUT of the per-call path.

    t1: (S, C1, 3), t2: (S, C2, C1, 3), Tmat: (S, A, F) with F == C2*L.
    Returns:
      w1   (S*C1, 3)       f32   conv1 taps
      w_bd (S*C2, 3*S*C1)  f32   block-diagonal conv2 weights,
                                 column index = k*(S*C1) + s*C1 + c1
      tall (S*F, A)        bf16  dictionary, row index = s*F + c2*L + l
    """
    S, C1, K1 = t1.shape
    _, C2, _, K2 = t2.shape
    A, F = Tmat.shape[1], Tmat.shape[2]
    if K1 != 3 or K2 != 3:
        raise NotImplementedError("kernel specialized for ksize1=ksize2=3, stride=1, pad=1")
    w1 = t1.reshape(S * C1, K1).astype(jnp.float32)
    w2p = jnp.transpose(t2, (0, 1, 3, 2)).astype(jnp.float32)        # (S, C2, 3, C1)
    eye = jnp.eye(S, dtype=jnp.float32)
    w_bd = (w2p[:, :, :, None, :] * eye[:, None, None, :, None]
            ).reshape(S * C2, K2 * S * C1)
    tall = jnp.transpose(Tmat, (0, 2, 1)).reshape(S * F, A).astype(jnp.bfloat16)
    return w1, w_bd, tall


@jax.jit
def network_forward(x, w1, w_bd, tall):
    """x: (B, S, L) f32; (w1, w_bd, tall) from prepare_params (computed once).
    Returns (gp1 (A, B), pred (S, B, C2, L)) matching the PyTorch Network."""
    B, S, L = x.shape
    SC1 = w1.shape[0]
    C1 = SC1 // S
    SC2 = w_bd.shape[0]
    C2 = SC2 // S
    SF, A = tall.shape
    if SF != SC2 * L:
        raise NotImplementedError("only the ksize=3/stride=1/pad=1/no-maxpool config is supported")
    BL = B * L

    # Per-call input prep (~10 KB): series-major, flattened to (b,l) lanes and
    # repeated C1 times along sublanes so in-kernel conv1 is pure broadcast math.
    x_rep = jnp.broadcast_to(
        jnp.transpose(x, (1, 0, 2)).reshape(S, 1, BL).astype(jnp.float32),
        (S, C1, BL)).reshape(SC1, BL)

    # Atom tiling: a few tiles to overlap the dictionary DMA with compute
    # while keeping per-step overhead (~0.35 us) small.
    TA = 128 if A % 128 == 0 else A
    nA = A // TA

    flops = (2 * B * SF * A                 # dictionary GEMM
             + 2 * SC2 * (3 * SC1) * BL     # block-diagonal conv2 matmul
             + 2 * SC1 * 3 * BL)            # conv1 taps
    transcendentals = SC1 * BL              # exp in SELU
    bytes_accessed = (x_rep.size * 4 + w1.size * 4 + w_bd.size * 4
                      + tall.size * 2 + B * A * 4 + SC2 * BL * 4)

    kernel = functools.partial(_deconfuse_kernel, S=S, C1=C1, C2=C2, B=B, L=L)

    gp_t, pred_raw = pl.pallas_call(
        kernel,
        grid=(nA,),
        in_specs=[
            pl.BlockSpec((SC1, BL), lambda i: (0, 0)),       # x_rep (resident)
            pl.BlockSpec((SC1, 3), lambda i: (0, 0)),        # conv1 taps
            pl.BlockSpec((SC2, 3 * SC1), lambda i: (0, 0)),  # block-diag conv2
            pl.BlockSpec((SF, TA), lambda i: (0, i)),        # dictionary tiles
        ],
        out_specs=(
            pl.BlockSpec((B, TA), lambda i: (0, i)),         # gp tile (lane-dense)
            pl.BlockSpec((SC2, BL), lambda i: (0, 0)),       # pred (resident)
        ),
        out_shape=(jax.ShapeDtypeStruct((B, A), jnp.float32),
                   jax.ShapeDtypeStruct((SC2, BL), jnp.float32)),
        scratch_shapes=[pltpu.VMEM((B, SC2 * L), jnp.float32)],
        compiler_params=pltpu.CompilerParams(
            dimension_semantics=("arbitrary",)),
        cost_estimate=pl.CostEstimate(flops=flops,
                                      transcendentals=transcendentals,
                                      bytes_accessed=bytes_accessed),
    )(x_rep, w1, w_bd, tall)

    gp1 = gp_t.T                                                  # (A, B)
    pred = pred_raw.reshape(S, C2, B, L).transpose(0, 2, 1, 3)    # (S, B, C2, L)
    return gp1, pred


# ----------------------------- reference ------------------------------------

def _conv1d_ref(x, w):
    """x: (B, Cin, L), w: (Cout, Cin, K); stride 1, pad K//2, no bias."""
    K = w.shape[-1]
    p = K // 2
    L = x.shape[-1]
    xp = jnp.pad(x, ((0, 0), (0, 0), (p, p)))
    out = 0.0
    for k in range(K):
        out = out + jnp.einsum('bil,oi->bol', xp[:, :, k:k + L], w[:, :, k],
                               precision=lax.Precision.HIGHEST)
    return out


def reference_forward(x, t1, t2, Tmat):
    """Plain-JAX f32 reference matching the PyTorch module semantics."""
    B, S, L = x.shape
    gp = 0.0
    outs = []
    for s in range(S):
        inp = x[:, s][:, None, :]                      # (B, 1, L)
        h = _conv1d_ref(inp, t1[s][:, None, :])        # (B, C1, L)
        h = SELU_SCALE * jnp.where(h > 0, h, SELU_ALPHA * (jnp.exp(h) - 1.0))
        z = _conv1d_ref(h, t2[s])                      # (B, C2, L)
        outs.append(z)
        gp = gp + jnp.dot(Tmat[s], z.reshape(B, -1).T,
                          precision=lax.Precision.HIGHEST)
    return gp, jnp.stack(outs, 0)


if __name__ == "__main__":
    # Shapes consistent with Network(inputs_shape=(4, 5, 16)) defaults:
    # out_planes1=8, out_planes2=16, ksize=3, no maxpool.
    B, S, L = 4, 5, 16
    C1, C2 = 8, 16
    dim2 = L                                  # calOutShape with k=3, pad=1, stride=1
    F = C2 * dim2                             # num_features = 256
    A = int(F * 0.5 * 5)                      # num_atoms   = 640

    key = jax.random.PRNGKey(0)
    k0, k1, k2, k3 = jax.random.split(key, 4)
    x = jax.random.normal(k0, (B, S, L), jnp.float32)
    t1 = jax.random.normal(k1, (S, C1, 3), jnp.float32) * 0.3      # T1 per series
    t2 = jax.random.normal(k2, (S, C2, C1, 3), jnp.float32) * 0.1  # T2 per series
    Tmat = jax.random.normal(k3, (S, A, F), jnp.float32) * 0.1     # T per series

    # Parameter-only preprocessing done ONCE (hoisted out of the per-call path).
    w1, w_bd, tall = prepare_params(t1, t2, Tmat)

    gp, pred = network_forward(x, w1, w_bd, tall)
    jax.block_until_ready(gp)
    jax.block_until_ready(pred)

    gp_gold, pred_gold = reference_forward(x, t1, t2, Tmat)

    gp_err = float(jnp.max(jnp.abs(gp - gp_gold)) / (jnp.max(jnp.abs(gp_gold)) + 1e-6))
    pr_err = float(jnp.max(jnp.abs(pred - pred_gold)) / (jnp.max(jnp.abs(pred_gold)) + 1e-6))
    assert gp.shape == (A, B), gp.shape
    assert pred.shape == (S, B, C2, L), pred.shape
    assert gp_err < 2e-2, f"gp mismatch: rel err {gp_err}"
    assert pr_err < 2e-2, f"conv outputs mismatch: rel err {pr_err}"

    print("KERNEL_OK")
</pallas_src>

<mosaic_0001>
module attributes {stable_mosaic.version = 11 : i64} {
  func.func @_deconfuse_kernel(%arg0: i32, %arg1: memref<40x64xf32, #tpu.memory_space<vmem>>, %arg2: memref<40x3xf32, #tpu.memory_space<vmem>>, %arg3: memref<80x120xf32, #tpu.memory_space<vmem>>, %arg4: memref<1280x128xbf16, #tpu.memory_space<vmem>>, %arg5: memref<4x128xf32, #tpu.memory_space<vmem>>, %arg6: memref<80x64xf32, #tpu.memory_space<vmem>>, %arg7: memref<4x1280xf32, #tpu.memory_space<vmem>>) attributes {dimension_semantics = [#tpu.dimension_semantics<arbitrary>], iteration_bounds = array<i64: 5>, scalar_prefetch = 0 : i64, scratch_operands = 1 : i64, tpu.core_type = #tpu.core_type<tc>, window_params = [{pipeline_mode = #tpu.pipeline_mode<synchronous>, transform_indices = @transform_0, window_bounds = array<i64: 40, 64>}, {pipeline_mode = #tpu.pipeline_mode<synchronous>, transform_indices = @transform_1, window_bounds = array<i64: 40, 3>}, {pipeline_mode = #tpu.pipeline_mode<synchronous>, transform_indices = @transform_2, window_bounds = array<i64: 80, 120>}, {transform_indices = @transform_3, window_bounds = array<i64: 1280, 128>}, {transform_indices = @transform_4, window_bounds = array<i64: 4, 128>}, {pipeline_mode = #tpu.pipeline_mode<synchronous>, transform_indices = @transform_5, window_bounds = array<i64: 80, 64>}]} {
    %c0_i32 = arith.constant 0 : i32
    %0 = arith.cmpi eq, %arg0, %c0_i32 : i32
    %1 = arith.extui %0 : i1 to i32
    %c0_i32_0 = arith.constant 0 : i32
    %2 = arith.cmpi ne, %1, %c0_i32_0 : i32
    scf.if %2 {
      %8 = tpu.iota {dimensions = array<i32: 1>} : vector<40x64xi32>
      %c16_i32 = arith.constant 16 : i32
      %c0_i32_6 = arith.constant 0 : i32
      %9 = arith.cmpi eq, %c16_i32, %c0_i32_6 : i32
      %c1_i32 = arith.constant 1 : i32
      %10 = arith.select %9, %c1_i32, %c16_i32 : i32
      %11 = vector.broadcast %10 : i32 to vector<40x64xi32>
      %12 = arith.remsi %8, %11 : vector<40x64xi32>
      %c0_i32_7 = arith.constant 0 : i32
      %13 = vector.broadcast %c0_i32_7 : i32 to vector<40x64xi32>
      %14 = arith.cmpi ne, %12, %13 : vector<40x64xi32>
      %c0_i32_8 = arith.constant 0 : i32
      %15 = vector.broadcast %c0_i32_8 : i32 to vector<40x64xi32>
      %16 = arith.cmpi slt, %12, %15 : vector<40x64xi32>
      %c0_i32_9 = arith.constant 0 : i32
      %17 = arith.cmpi slt, %10, %c0_i32_9 : i32
      %18 = vector.broadcast %17 : i1 to vector<40x64xi1>
      %19 = vector.broadcast %18 : vector<40x64xi1> to vector<40x64xi1>
      %20 = arith.xori %16, %19 : vector<40x64xi1>
      %21 = arith.andi %20, %14 : vector<40x64xi1>
      %22 = vector.broadcast %10 : i32 to vector<40x64xi32>
      %23 = arith.addi %12, %22 : vector<40x64xi32>
      %24 = arith.select %21, %23, %12 : vector<40x64xi1>, vector<40x64xi32>
      %c0_i32_10 = arith.constant 0 : i32
      %25 = vector.broadcast %c0_i32_10 : i32 to vector<40x64xi32>
      %26 = arith.cmpi eq, %24, %25 : vector<40x64xi32>
      %c15_i32 = arith.constant 15 : i32
      %27 = vector.broadcast %c15_i32 : i32 to vector<40x64xi32>
      %28 = arith.cmpi eq, %24, %27 : vector<40x64xi32>
      %c0_11 = arith.constant 0 : index
      %c0_12 = arith.constant 0 : index
      %29 = vector.load %arg1[%c0_11, %c0_12] : memref<40x64xf32, #tpu.memory_space<vmem>>, vector<40x64xf32>
      %c0_13 = arith.constant 0 : index
      %c0_14 = arith.constant 0 : index
      %30 = vector.load %arg2[%c0_13, %c0_14] : memref<40x3xf32, #tpu.memory_space<vmem>>, vector<40x1xf32>
      %c1_i32_15 = arith.constant 1 : i32
      %31 = tpu.dynamic_rotate %29 by %c1_i32_15 dim 1 : vector<40x64xf32>, i32 -> vector<40x64xf32>
      %cst_16 = arith.constant 0.000000e+00 : f32
      %32 = vector.broadcast %cst_16 : f32 to vector<40x64xf32>
      %33 = arith.select %26, %32, %31 : vector<40x64xi1>, vector<40x64xf32>
      %34 = vector.broadcast %30 : vector<40x1xf32> to vector<40x64xf32>
      %35 = arith.mulf %34, %33 : vector<40x64xf32>
      %c0_17 = arith.constant 0 : index
      %c1 = arith.constant 1 : index
      %36 = vector.load %arg2[%c0_17, %c1] : memref<40x3xf32, #tpu.memory_space<vmem>>, vector<40x1xf32>
      %37 = vector.broadcast %36 : vector<40x1xf32> to vector<40x64xf32>
      %38 = arith.mulf %37, %29 : vector<40x64xf32>
      %39 = arith.addf %35, %38 : vector<40x64xf32>
      %c0_18 = arith.constant 0 : index
      %c2 = arith.constant 2 : index
      %40 = vector.load %arg2[%c0_18, %c2] : memref<40x3xf32, #tpu.memory_space<vmem>>, vector<40x1xf32>
      %c63_i32 = arith.constant 63 : i32
      %41 = tpu.dynamic_rotate %29 by %c63_i32 dim 1 : vector<40x64xf32>, i32 -> vector<40x64xf32>
      %cst_19 = arith.constant 0.000000e+00 : f32
      %42 = vector.broadcast %cst_19 : f32 to vector<40x64xf32>
      %43 = arith.select %28, %42, %41 : vector<40x64xi1>, vector<40x64xf32>
      %44 = vector.broadcast %40 : vector<40x1xf32> to vector<40x64xf32>
      %45 = arith.mulf %44, %43 : vector<40x64xf32>
      %46 = arith.addf %39, %45 : vector<40x64xf32>
      %cst_20 = arith.constant 0.000000e+00 : f32
      %47 = vector.broadcast %cst_20 : f32 to vector<40x64xf32>
      %48 = arith.cmpf ogt, %46, %47 : vector<40x64xf32>
      %49 = math.exp %46 : vector<40x64xf32>
      %cst_21 = arith.constant 1.000000e+00 : f32
      %50 = vector.broadcast %cst_21 : f32 to vector<40x64xf32>
      %51 = arith.subf %49, %50 : vector<40x64xf32>
      %cst_22 = arith.constant 1.67326319 : f32
      %52 = vector.broadcast %cst_22 : f32 to vector<40x64xf32>
      %53 = arith.mulf %52, %51 : vector<40x64xf32>
      %54 = arith.select %48, %46, %53 : vector<40x64xi1>, vector<40x64xf32>
      %cst_23 = arith.constant 1.05070102 : f32
      %55 = vector.broadcast %cst_23 : f32 to vector<40x64xf32>
      %56 = arith.mulf %55, %54 : vector<40x64xf32>
      %c1_i32_24 = arith.constant 1 : i32
      %57 = tpu.dynamic_rotate %56 by %c1_i32_24 dim 1 : vector<40x64xf32>, i32 -> vector<40x64xf32>
      %cst_25 = arith.constant 0.000000e+00 : f32
      %58 = vector.broadcast %cst_25 : f32 to vector<40x64xf32>
      %59 = arith.select %26, %58, %57 : vector<40x64xi1>, vector<40x64xf32>
      %c63_i32_26 = arith.constant 63 : i32
      %60 = tpu.dynamic_rotate %56 by %c63_i32_26 dim 1 : vector<40x64xf32>, i32 -> vector<40x64xf32>
      %cst_27 = arith.constant 0.000000e+00 : f32
      %61 = vector.broadcast %cst_27 : f32 to vector<40x64xf32>
      %62 = arith.select %28, %61, %60 : vector<40x64xi1>, vector<40x64xf32>
      %63 = tpu.concatenate %59, %56, %62 in 0 : vector<40x64xf32>, vector<40x64xf32>, vector<40x64xf32> -> vector<120x64xf32>
      %c0_28 = arith.constant 0 : index
      %c0_29 = arith.constant 0 : index
      %64 = vector.load %arg3[%c0_28, %c0_29] : memref<80x120xf32, #tpu.memory_space<vmem>>, vector<80x120xf32>
      %cst_30 = arith.constant dense<0.000000e+00> : vector<80x64xf32>
      %65 = tpu.matmul %64, %63, %cst_30 {dimension_numbers = #tpu.dot_dimension_numbers<[1], [0], [0], [1], [0, 0, 1, 1], [], []>} : vector<80x120xf32>, vector<120x64xf32>, vector<80x64xf32> -> vector<80x64xf32>
      %c0_31 = arith.constant 0 : index
      %c0_32 = arith.constant 0 : index
      %66 = vector.load %arg6[%c0_31, %c0_32] : memref<80x64xf32, #tpu.memory_space<vmem>>, vector<80x64xf32>
      tpu.vector_store %arg6[%c0_31, %c0_32], %65 {strides = array<i32>} : memref<80x64xf32, #tpu.memory_space<vmem>>, vector<80x64xf32>,
      %67 = vector.shape_cast %65 : vector<80x64xf32> to vector<80x4x16xf32>
      %68 = tpu.transpose %67, [1, 0, 2] : vector<80x4x16xf32> -> vector<4x80x16xf32>
      %69 = vector.shape_cast %68 : vector<4x80x16xf32> to vector<4x1280xf32>
      %c0_33 = arith.constant 0 : index
      %c0_34 = arith.constant 0 : index
      %70 = vector.load %arg7[%c0_33, %c0_34] : memref<4x1280xf32, #tpu.memory_space<vmem>>, vector<4x1280xf32>
      tpu.vector_store %arg7[%c0_33, %c0_34], %69 {strides = array<i32>} : memref<4x1280xf32, #tpu.memory_space<vmem>>, vector<4x1280xf32>,
    } else {
    }
    %c0 = arith.constant 0 : index
    %c0_1 = arith.constant 0 : index
    %3 = vector.load %arg7[%c0, %c0_1] : memref<4x1280xf32, #tpu.memory_space<vmem>>, vector<4x1280xf32>
    %c0_2 = arith.constant 0 : index
    %c0_3 = arith.constant 0 : index
    %4 = vector.load %arg4[%c0_2, %c0_3] : memref<1280x128xbf16, #tpu.memory_space<vmem>>, vector<1280x128xbf16>
    %5 = arith.extf %4 : vector<1280x128xbf16> to vector<1280x128xf32>
    %cst = arith.constant dense<0.000000e+00> : vector<4x128xf32>
    %6 = tpu.matmul %3, %5, %cst {dimension_numbers = #tpu.dot_dimension_numbers<[1], [0], [0], [1], [0, 0, 1, 1], [], []>} : vector<4x1280xf32>, vector<1280x128xf32>, vector<4x128xf32> -> vector<4x128xf32>
    %c0_4 = arith.constant 0 : index
    %c0_5 = arith.constant 0 : index
    %7 = vector.load %arg5[%c0_4, %c0_5] : memref<4x128xf32, #tpu.memory_space<vmem>>, vector<4x128xf32>
    tpu.vector_store %arg5[%c0_4, %c0_5], %6 {strides = array<i32>} : memref<4x128xf32, #tpu.memory_space<vmem>>, vector<4x128xf32>,
    return
  }
  func.func @transform_0(%arg0: i32) -> (i32, i32) {
    %c0_i32 = arith.constant 0 : i32
    %c0_i32_0 = arith.constant 0 : i32
    %c0_i32_1 = arith.constant 0 : i32
    return %c0_i32, %c0_i32_0 : i32, i32
  }
  func.func @transform_1(%arg0: i32) -> (i32, i32) {
    %c0_i32 = arith.constant 0 : i32
    %c0_i32_0 = arith.constant 0 : i32
    %c0_i32_1 = arith.constant 0 : i32
    return %c0_i32, %c0_i32_0 : i32, i32
  }
  func.func @transform_2(%arg0: i32) -> (i32, i32) {
    %c0_i32 = arith.constant 0 : i32
    %c0_i32_0 = arith.constant 0 : i32
    %c0_i32_1 = arith.constant 0 : i32
    return %c0_i32, %c0_i32_0 : i32, i32
  }
  func.func @transform_3(%arg0: i32) -> (i32, i32) {
    %c0_i32 = arith.constant 0 : i32
    %c0_i32_0 = arith.constant 0 : i32
    return %c0_i32, %arg0 : i32, i32
  }
  func.func @transform_4(%arg0: i32) -> (i32, i32) {
    %c0_i32 = arith.constant 0 : i32
    %c0_i32_0 = arith.constant 0 : i32
    return %c0_i32, %arg0 : i32, i32
  }
  func.func @transform_5(%arg0: i32) -> (i32, i32) {
    %c0_i32 = arith.constant 0 : i32
    %c0_i32_0 = arith.constant 0 : i32
    %c0_i32_1 = arith.constant 0 : i32
    return %c0_i32, %c0_i32_0 : i32, i32
  }
}

</mosaic_0001>

<llo_original>
// kernel: network_forward.1
$region0: #{network_forward.1}
  #allocation0 [shape = 'u32[]', space=smem, size = 0x4, offset = 0x4, fixed_abs, tag = 'smem constant byte address 0x4 - core index']
  #allocation1 [shape = 'u32[72,128]{1,0:T(1,128)}', space=vmem, size = 0x9000, scoped, tag = 'internal scratch']
  #allocation2 [shape = 'f32[4,1280]{1,0:T(4,128)}', space=vmem, size = 0x5000, scoped, tag = 'scratch operand']
  %s0 = inlined_call_operand.vmem [shape: f32[40,64], index: 0, kind: input, shape index: {}]
  %s1 = inlined_call_operand.vmem [shape: f32[40,3], index: 1, kind: input, shape index: {}]
  %s2 = inlined_call_operand.hbm [shape: f32[80,120], index: 2, kind: input, shape index: {}]
  %s3 = inlined_call_operand.hbm [shape: bf16[1280,640], index: 3, kind: input, shape index: {}]
  %s4 = inlined_call_operand.hbm [shape: f32[4,640], index: 4, kind: output, shape index: {0}]
  %s5 = inlined_call_operand.vmem [shape: f32[80,64], index: 5, kind: output, shape index: {1}]
  %6 = xla_tuple %s4, %s5
  %s7 = sld [smem:[#allocation0]]
  $region69: #{network_forward.1} parent=0
    _
  %s9 = ssub.s32 1, %s7
  %s10 = scalar_select 0, %s9, %s7
  $region1: #{network_forward.1} parent=0
    #allocation3 [shape = 'u8[40960]{0}', space=vmem, size = 0xa000, scoped, tag = 'input window, operand 2, single buffered']
    #allocation4 [shape = 's32[2]{0}', space=sflag, size = 0x8, scoped, tag = 'scoped memory for network_forward.1']
    #allocation5 [shape = 's32[2]{0}', space=sflag, size = 0x8, scoped, tag = 'scoped memory for network_forward.1']
    #allocation6 [shape = 'u8[655360]{0}', space=vmem, size = 0xa0000, scoped, tag = 'input window, operand 3']
    #allocation7 [shape = 's32[2]{0}', space=sflag, size = 0x8, scoped, tag = 'scoped memory for network_forward.1']
    #allocation8 [shape = 'u8[4096]{0}', space=vmem, size = 0x1000, scoped, tag = 'output window, operand 0']
    %11 = vsyncpa [#allocation4], 0
    %12 = vsyncpa [#allocation7], 0
    %s13 = scalar_lea.sflag [#allocation7], 1
    %14 = vsyncpa %s13, 0
    %15 = vsyncpa [#allocation5], 0
    %s16 = scalar_lea.sflag [#allocation5], 1
    %17 = vsyncpa %s16, 0
    loop: start=0, step=1, limit=7
    $region2: #{network_forward.1} parent=1 // loop_pre_header
      _
    $region3: #{network_forward.1} parent=1 // loop_header
      %s19 = sphi 0, %s23
      %p20 = scmp.ge.s32.totalorder %s19, 7
      %s27 = sphi 0, %s27
      %s29 = sphi 0, %s27
      %s30 = sphi 0, %s29
      %s44 = sphi 0, %s30
      %s48 = sphi 0, %s48
      %s50 = sphi 0, %s48
      %s51 = sphi 0, %s50
      %s65 = sphi 0, %s51
      %s69 = sphi 0, %s69
      %s71 = sphi 0, %s69
      %s72 = sphi 0, %s71
      %s86 = sphi 0, %s72
      %s92 = sphi 0, %s94
      %s95 = sphi 0, %s92
      %s96 = sphi 0, %s95
      %s112 = sphi 0, %s96
      %s118 = sphi 0, %s120
      %s121 = sphi 0, %s118
      %s122 = sphi 0, %s121
      %s138 = sphi 0, %s122
      %s142 = sphi 0, %s142
      %s144 = sphi 0, %s142
      %s145 = sphi 0, %s144
      %s159 = sphi 0, %s145
    $region4: #{network_forward.1} parent=1 // loop_header_branch
      %22 = sbr.rel (%p20) target = $region8
    $region5: #{network_forward.1} parent=1 // loop_body
      %s24 = ssub.s32 %s19, 1
      %s25 = ssub.s32 %s19, 2
      %s26 = sadd.s32 %s19, 1
      %s28 = sadd.s32 %s27, 1
      %p31 = scmp.eq.s32.totalorder %s19, 4
      %p32 = scmp.ne.s32.totalorder %s27, %s29
      %p33 = scmp.eq.s32.totalorder %s19, 0
      %p34 = por %p32, %p33
      %p35 = scmp.ne.s32.totalorder %s27, %s29
      %p36 = scmp.eq.s32.totalorder %s24, 4
      %p37 = por %p35, %p36
      %p38 = scmp.ne.s32.totalorder %s29, %s30
      %p39 = scmp.eq.s32.totalorder %s24, 0
      %p40 = por %p38, %p39
      %p41 = scmp.ne.s32.totalorder %s29, %s30
      %p42 = scmp.eq.s32.totalorder %s25, 4
      %p43 = por %p41, %p42
      %p45 = scmp.ne.s32.totalorder %s30, %s44
      %p46 = scmp.eq.s32.totalorder %s25, 0
      %p47 = por %p45, %p46
      %s49 = sadd.s32 %s48, 1
      %p52 = scmp.eq.s32.totalorder %s19, 4
      %p53 = scmp.ne.s32.totalorder %s48, %s50
      %p54 = scmp.eq.s32.totalorder %s19, 0
      %p55 = por %p53, %p54
      %p56 = scmp.ne.s32.totalorder %s48, %s50
      %p57 = scmp.eq.s32.totalorder %s24, 4
      %p58 = por %p56, %p57
      %p59 = scmp.ne.s32.totalorder %s50, %s51
      %p60 = scmp.eq.s32.totalorder %s24, 0
      %p61 = por %p59, %p60
      %p62 = scmp.ne.s32.totalorder %s50, %s51
      %p63 = scmp.eq.s32.totalorder %s25, 4
      %p64 = por %p62, %p63
      %p66 = scmp.ne.s32.totalorder %s51, %s65
      %p67 = scmp.eq.s32.totalorder %s25, 0
      %p68 = por %p66, %p67
      %s70 = sadd.s32 %s69, 1
      %p73 = scmp.eq.s32.totalorder %s19, 4
      %p74 = scmp.ne.s32.totalorder %s69, %s71
      %p75 = scmp.eq.s32.totalorder %s19, 0
      %p76 = por %p74, %p75
      %p77 = scmp.ne.s32.totalorder %s69, %s71
      %p78 = scmp.eq.s32.totalorder %s24, 4
      %p79 = por %p77, %p78
      %p80 = scmp.ne.s32.totalorder %s71, %s72
      %p81 = scmp.eq.s32.totalorder %s24, 0
      %p82 = por %p80, %p81
      %p83 = scmp.ne.s32.totalorder %s71, %s72
      %p84 = scmp.eq.s32.totalorder %s25, 4
      %p85 = por %p83, %p84
      %p87 = scmp.ne.s32.totalorder %s72, %s86
      %p88 = scmp.eq.s32.totalorder %s25, 0
      %p89 = por %p87, %p88
      %s90 = ssub.s32 %s19, %s26
      %p91 = scmp.eq.s32.totalorder %s90, 0
      %s93 = sadd.s32 %s92, 1
      %s94 = scalar_select %p91, %s92, %s93
      %p97 = pneg %p91
      %p98 = scmp.eq.s32.totalorder %s19, 4
      %p99 = por %p97, %p98
      %p100 = scmp.ne.s32.totalorder %s92, %s95
      %p101 = scmp.eq.s32.totalorder %s19, 0
      %p102 = por %p100, %p101
      %p103 = scmp.ne.s32.totalorder %s92, %s95
      %p104 = scmp.eq.s32.totalorder %s24, 4
      %p105 = por %p103, %p104
      %p106 = scmp.ne.s32.totalorder %s95, %s96
      %p107 = scmp.eq.s32.totalorder %s24, 0
      %p108 = por %p106, %p107
      %p109 = scmp.ne.s32.totalorder %s95, %s96
      %p110 = scmp.eq.s32.totalorder %s25, 4
      %p111 = por %p109, %p110
      %p113 = scmp.ne.s32.totalorder %s96, %s112
      %p114 = scmp.eq.s32.totalorder %s25, 0
      %p115 = por %p113, %p114
      %s116 = ssub.s32 %s19, %s26
      %p117 = scmp.eq.s32.totalorder %s116, 0
      %s119 = sadd.s32 %s118, 1
      %s120 = scalar_select %p117, %s118, %s119
      %p123 = pneg %p117
      %p124 = scmp.eq.s32.totalorder %s19, 4
      %p125 = por %p123, %p124
      %p126 = scmp.ne.s32.totalorder %s118, %s121
      %p127 = scmp.eq.s32.totalorder %s19, 0
      %p128 = por %p126, %p127
      %p129 = scmp.ne.s32.totalorder %s118, %s121
      %p130 = scmp.eq.s32.totalorder %s24, 4
      %p131 = por %p129, %p130
      %p132 = scmp.ne.s32.totalorder %s121, %s122
      %p133 = scmp.eq.s32.totalorder %s24, 0
      %p134 = por %p132, %p133
      %p135 = scmp.ne.s32.totalorder %s121, %s122
      %p136 = scmp.eq.s32.totalorder %s25, 4
      %p137 = por %p135, %p136
      %p139 = scmp.ne.s32.totalorder %s122, %s138
      %p140 = scmp.eq.s32.totalorder %s25, 0
      %p141 = por %p139, %p140
      %s143 = sadd.s32 %s142, 1
      %p146 = scmp.eq.s32.totalorder %s19, 4
      %p147 = scmp.ne.s32.totalorder %s142, %s144
      %p148 = scmp.eq.s32.totalorder %s19, 0
      %p149 = por %p147, %p148
      %p150 = scmp.ne.s32.totalorder %s142, %s144
      %p151 = scmp.eq.s32.totalorder %s24, 4
      %p152 = por %p150, %p151
      %p153 = scmp.ne.s32.totalorder %s144, %s145
      %p154 = scmp.eq.s32.totalorder %s24, 0
      %p155 = por %p153, %p154
      %p156 = scmp.ne.s32.totalorder %s144, %s145
      %p157 = scmp.eq.s32.totalorder %s25, 4
      %p158 = por %p156, %p157
      %p160 = scmp.ne.s32.totalorder %s145, %s159
      %p161 = scmp.eq.s32.totalorder %s25, 0
      %p162 = por %p160, %p161
      %p163 = scmp.le.s32.totalorder 1, %s19
      %p164 = scmp.lt.s32.totalorder %s19, 6
      %p165 = pnand %p163, %p164
      %p166 = pneg %p165
      // Predicated region
      $region9: #{network_forward.1} parent=5 // pred_check
        _
      $region10: #{network_forward.1} parent=5 // pred_check_branch
        %168 = sbr.rel (%p165) target = $region12
      $region11: #{network_forward.1} parent=5 // pred_region
        %s169 = ssub.s32 %s19, 1
        // Predicated region
        $region13: #{network_forward.1} parent=11 // pred_check
          %p170 = pneg %p40
        $region14: #{network_forward.1} parent=11 // pred_check_branch
          %172 = sbr.rel (%p170) target = $region16
        $region15: #{network_forward.1} parent=11 // pred_region
          _
        $region16: #{network_forward.1} parent=11 // pred_fallthru
          _
        // Predicated region
        $region17: #{network_forward.1} parent=11 // pred_check
          %p173 = pneg %p61
        $region18: #{network_forward.1} parent=11 // pred_check_branch
          %175 = sbr.rel (%p173) target = $region20
        $region19: #{network_forward.1} parent=11 // pred_region
          _
        $region20: #{network_forward.1} parent=11 // pred_fallthru
          _
        // Predicated region
        $region21: #{network_forward.1} parent=11 // pred_check
          %p176 = pneg %p82
        $region22: #{network_forward.1} parent=11 // pred_check_branch
          %178 = sbr.rel (%p176) target = $region24
        $region23: #{network_forward.1} parent=11 // pred_region
          %180 = vsyncadd [#allocation4], 0
          %s181 = sshll.u32 %s2, 4
          %s182 = int_to_ptr.hbm [resolvable:$true] %s181
          %s183 = sshll.u32 [#allocation3], 4
          %s184 = int_to_ptr.vmem [resolvable:$true] %s183
          %189 = dma.hbm_to_vmem [thread:$0]  %s182, 1280, %s184, [#allocation4], 128, 128, 8
        $region24: #{network_forward.1} parent=11 // pred_fallthru
          _
      $region12: #{network_forward.1} parent=5 // pred_fallthru
        _
      %p190 = scmp.lt.s32.totalorder %s19, 5
      // Predicated region
      $region25: #{network_forward.1} parent=5 // pred_check
        %p191 = pneg %p190
      $region26: #{network_forward.1} parent=5 // pred_check_branch
        %193 = sbr.rel (%p191) target = $region28
      $region27: #{network_forward.1} parent=5 // pred_region
        // Predicated region
        $region29: #{network_forward.1} parent=27 // pred_check
          %p194 = pneg %p102
        $region30: #{network_forward.1} parent=27 // pred_check_branch
          %196 = sbr.rel (%p194) target = $region32
        $region31: #{network_forward.1} parent=27 // pred_region
          %s197 = sand.u32 %s92, 1
          %s198 = scalar_lea.sflag [#allocation7], %s197
          %s199 = sand.u32 %s92, 1
          %s200 = smul.addr %s199, 640
          %s201 = scalar_lea.vmem [#allocation6], %s200
          %203 = vsyncadd %s198, 0
          %s204 = smul.addr %s19, 4
          %s205 = scalar_lea.hbm %s3, %s204
          %s206 = sshll.u32 %s205, 4
          %s207 = int_to_ptr.hbm [resolvable:$true] %s206
          %s208 = sshll.u32 %s201, 4
          %s209 = int_to_ptr.vmem [resolvable:$true] %s208
          %214 = dma.hbm_to_vmem [thread:$0]  %s207, 10240, %s209, %s198, 320, 64, 4
        $region32: #{network_forward.1} parent=27 // pred_fallthru
          _
      $region28: #{network_forward.1} parent=5 // pred_fallthru
        _
      %p215 = scmp.le.s32.totalorder 1, %s19
      %p216 = scmp.lt.s32.totalorder %s19, 6
      %p217 = pnand %p215, %p216
      %p218 = pneg %p217
      // Predicated region
      $region33: #{network_forward.1} parent=5 // pred_check
        _
      $region34: #{network_forward.1} parent=5 // pred_check_branch
        %220 = sbr.rel (%p217) target = $region36
      $region35: #{network_forward.1} parent=5 // pred_region
        %s221 = ssub.s32 %s19, 1
        // Predicated region
        $region37: #{network_forward.1} parent=35 // pred_check
          %p222 = pneg %p82
        $region38: #{network_forward.1} parent=35 // pred_check_branch
          %224 = sbr.rel (%p222) target = $region40
        $region39: #{network_forward.1} parent=35 // pred_region
          %226 = dma.done [#allocation4], 1280
        $region40: #{network_forward.1} parent=35 // pred_fallthru
          _
        %s227 = sand.u32 %s95, 1
        %s228 = scalar_lea.sflag [#allocation7], %s227
        %s229 = sand.u32 %s95, 1
        %s230 = smul.addr %s229, 640
        %s231 = scalar_lea.vmem [#allocation6], %s230
        // Predicated region
        $region41: #{network_forward.1} parent=35 // pred_check
          %p232 = pneg %p108
        $region42: #{network_forward.1} parent=35 // pred_check_branch
          %234 = sbr.rel (%p232) target = $region44
        $region43: #{network_forward.1} parent=35 // pred_region
          %236 = dma.done %s228, 10240
        $region44: #{network_forward.1} parent=35 // pred_fallthru
          _
        %p237 = pneg %p40
        %p238 = pneg %p37
        %p239 = pneg %p61
        %p240 = pneg %p58
        %p241 = pneg %p82
        %p242 = pneg %p79
        %s243 = sand.u32 %s95, 1
        %s244 = scalar_lea.sflag [#allocation7], %s243
        %s245 = sand.u32 %s95, 1
        %s246 = smul.addr %s245, 640
        %s247 = scalar_lea.vmem [#allocation6], %s246
        %p248 = pneg %p108
        %p249 = pneg %p105
        %p250 = pneg %p134
        %p251 = pneg %p131
        %s252 = sand.u32 %s121, 1
        %s253 = scalar_lea.sflag [#allocation5], %s252
        %s254 = sand.u32 %s121, 1
        %s255 = smul.addr %s254, 4
        %s256 = scalar_lea.vmem [#allocation8], %s255
        %p257 = pneg %p155
        %p258 = pneg %p152
        %p259 = scmp.eq.s32.totalorder %s24, 0
        // Predicated region
        $region45: #{network_forward.1} parent=35 // pred_check
          %p260 = pneg %p259
        $region46: #{network_forward.1} parent=35 // pred_check_branch
          %262 = sbr.rel (%p260) target = $region48
        $region47: #{network_forward.1} parent=35 // pred_region
          %v263 = vlaneseq
          %v264 = vand.u32 %v263, 127
          %vm265 = vcmp.lt.s32.totalorder %v264, 0
          %v266 = vsub.s32 0, %v264
          %v267 = vsel %vm265, %v266, %v264
          %v268 = vshrl.u32 %v267, 4
          %v269 = vand.u32 %v267, 15
          %v270 = vsub.s32 0, %v269
          %v271 = vsel %vm265, %v270, %v269
          %vm272 = vcmp.ne.s32.totalorder %v271, 0
          %vm273 = vcmp.lt.s32.totalorder %v271, 0
          %vm274 = vmand %vm273, %vm272
          %v275 = vadd.s32 %v271, 16
          %v276 = vsel %vm274, %v275, %v271
          %vm277 = vcmp.eq.s32.totalorder %v276, 0
          %vm278 = vcmp.eq.s32.totalorder %v276, 15
          %v279 = vld [vmem:[%s0] sm:$0xff]
          %v280 = vld [vmem:[%s0 + $0x8] sm:$0xff]
          %v281 = vld [vmem:[%s0 + $0x10] sm:$0xff]
          %v282 = vld [vmem:[%s0 + $0x18] sm:$0xff]
          %v283 = vld [vmem:[%s0 + $0x20] sm:$0xff]
          %v284 = vld [vmem:[%s1] sm:$0xff]
          %v285 = vld [vmem:[%s1 + $0x8] sm:$0xff]
          %v286 = vld [vmem:[%s1 + $0x10] sm:$0xff]
          %v287 = vld [vmem:[%s1 + $0x18] sm:$0xff]
          %v288 = vld [vmem:[%s1 + $0x20] sm:$0xff]
          %vm289 = vcmask 1048064
          %290 = vrot.lane.b32.xlu0 %v279, 64
          %v291 = vpop.permute.xlu0 %290
          %v292 = vsel %vm289, %v291, %v279
          %293 = vrot.lane.b32.xlu0 %v280, 64
          %v294 = vpop.permute.xlu0 %293
          %v295 = vsel %vm289, %v294, %v280
          %296 = vrot.lane.b32.xlu0 %v281, 64
          %v297 = vpop.permute.xlu0 %296
          %v298 = vsel %vm289, %v297, %v281
          %299 = vrot.lane.b32.xlu0 %v282, 64
          %v300 = vpop.permute.xlu0 %299
          %v301 = vsel %vm289, %v300, %v282
          %302 = vrot.lane.b32.xlu0 %v283, 64
          %v303 = vpop.permute.xlu0 %302
          %v304 = vsel %vm289, %v303, %v283
          %305 = vrot.lane.b32.xlu0 %v292, 64
          %v306 = vpop.permute.xlu0 %305
          %307 = vrot.lane.b32.xlu0 %v295, 64
          %v308 = vpop.permute.xlu0 %307
          %309 = vrot.lane.b32.xlu0 %v298, 64
          %v310 = vpop.permute.xlu0 %309
          %311 = vrot.lane.b32.xlu0 %v301, 64
          %v312 = vpop.permute.xlu0 %311
          %313 = vrot.lane.b32.xlu0 %v304, 64
          %v314 = vpop.permute.xlu0 %313
          %v315 = vsel %vm289, %v306, %v279
          %v316 = vsel %vm289, %v308, %v280
          %v317 = vsel %vm289, %v310, %v281
          %v318 = vsel %vm289, %v312, %v282
          %v319 = vsel %vm289, %v314, %v283
          %325 = vrot.lane.b32.xlu0 %v315, 65
          %v326 = vpop.permute.xlu0 %325
          %327 = vrot.lane.b32.xlu0 %v316, 65
          %v328 = vpop.permute.xlu0 %327
          %329 = vrot.lane.b32.xlu0 %v317, 65
          %v330 = vpop.permute.xlu0 %329
          %331 = vrot.lane.b32.xlu0 %v318, 65
          %v332 = vpop.permute.xlu0 %331
          %333 = vrot.lane.b32.xlu0 %v319, 65
          %v334 = vpop.permute.xlu0 %333
          %v340 = vsel %vm277, 0.0, %v326
          %v341 = vsel %vm277, 0.0, %v328
          %v342 = vsel %vm277, 0.0, %v330
          %v343 = vsel %vm277, 0.0, %v332
          %v344 = vsel %vm277, 0.0, %v334
          %346 = vset.pattern.permute.xlu0 0
          %347 = vperm.xlu0 %346, %v284
          %v348 = vpop.permute.xlu0 %347
          %351 = vset.pattern.permute.xlu0 0
          %352 = vperm.xlu0 %351, %v285
          %v353 = vpop.permute.xlu0 %352
          %356 = vset.pattern.permute.xlu0 0
          %357 = vperm.xlu0 %356, %v286
          %v358 = vpop.permute.xlu0 %357
          %361 = vset.pattern.permute.xlu0 0
          %362 = vperm.xlu0 %361, %v287
          %v363 = vpop.permute.xlu0 %362
          %366 = vset.pattern.permute.xlu0 0
          %367 = vperm.xlu0 %366, %v288
          %v368 = vpop.permute.xlu0 %367
          %v370 = vmul.f32 %v348, %v340
          %v371 = vmul.f32 %v353, %v341
          %v372 = vmul.f32 %v358, %v342
          %v373 = vmul.f32 %v363, %v343
          %v374 = vmul.f32 %v368, %v344
          %375 = vset.pattern.permute.xlu0 1
          %376 = vperm.xlu0 %375, %v284
          %v377 = vpop.permute.xlu0 %376
          %379 = vset.pattern.permute.xlu0 1
          %380 = vperm.xlu0 %379, %v285
          %v381 = vpop.permute.xlu0 %380
          %383 = vset.pattern.permute.xlu0 1
          %384 = vperm.xlu0 %383, %v286
          %v385 = vpop.permute.xlu0 %384
          %387 = vset.pattern.permute.xlu0 1
          %388 = vperm.xlu0 %387, %v287
          %v389 = vpop.permute.xlu0 %388
          %391 = vset.pattern.permute.xlu0 1
          %392 = vperm.xlu0 %391, %v288
          %v393 = vpop.permute.xlu0 %392
          %v395 = vmul.f32 %v377, %v279
          %v396 = vmul.f32 %v381, %v280
          %v397 = vmul.f32 %v385, %v281
          %v398 = vmul.f32 %v389, %v282
          %v399 = vmul.f32 %v393, %v283
          %v400 = vadd.f32 %v370, %v395
          %v401 = vadd.f32 %v371, %v396
          %v402 = vadd.f32 %v372, %v397
          %v403 = vadd.f32 %v373, %v398
          %v404 = vadd.f32 %v374, %v399
          %405 = vrot.lane.b32.xlu0 %v315, 127
          %v406 = vpop.permute.xlu0 %405
          %407 = vrot.lane.b32.xlu0 %v316, 127
          %v408 = vpop.permute.xlu0 %407
          %409 = vrot.lane.b32.xlu0 %v317, 127
          %v410 = vpop.permute.xlu0 %409
          %411 = vrot.lane.b32.xlu0 %v318, 127
          %v412 = vpop.permute.xlu0 %411
          %413 = vrot.lane.b32.xlu0 %v319, 127
          %v414 = vpop.permute.xlu0 %413
          %v420 = vsel %vm278, 0.0, %v406
          %v421 = vsel %vm278, 0.0, %v408
          %v422 = vsel %vm278, 0.0, %v410
          %v423 = vsel %vm278, 0.0, %v412
          %v424 = vsel %vm278, 0.0, %v414
          %425 = vset.pattern.permute.xlu0 2
          %426 = vperm.xlu0 %425, %v284
          %v427 = vpop.permute.xlu0 %426
          %429 = vset.pattern.permute.xlu0 2
          %430 = vperm.xlu0 %429, %v285
          %v431 = vpop.permute.xlu0 %430
          %433 = vset.pattern.permute.xlu0 2
          %434 = vperm.xlu0 %433, %v286
          %v435 = vpop.permute.xlu0 %434
          %437 = vset.pattern.permute.xlu0 2
          %438 = vperm.xlu0 %437, %v287
          %v439 = vpop.permute.xlu0 %438
          %441 = vset.pattern.permute.xlu0 2
          %442 = vperm.xlu0 %441, %v288
          %v443 = vpop.permute.xlu0 %442
          %v445 = vmul.f32 %v427, %v420
          %v446 = vmul.f32 %v431, %v421
          %v447 = vmul.f32 %v435, %v422
          %v448 = vmul.f32 %v439, %v423
          %v449 = vmul.f32 %v443, %v424
          %v450 = vadd.f32 %v400, %v445
          %v451 = vadd.f32 %v401, %v446
          %v452 = vadd.f32 %v402, %v447
          %v453 = vadd.f32 %v403, %v448
          %v454 = vadd.f32 %v404, %v449
          %vm455 = vcmp.gt.f32.partialorder %v450, 0.0
          %vm456 = vcmp.gt.f32.partialorder %v451, 0.0
          %vm457 = vcmp.gt.f32.partialorder %v452, 0.0
          %vm458 = vcmp.gt.f32.partialorder %v453, 0.0
          %vm459 = vcmp.gt.f32.partialorder %v454, 0.0
          %v460 = vmul.f32 %v450, 1.442695
          %v461 = vpow.pop %v460
          %v462 = vmul.f32 %v451, 1.442695
          %v463 = vpow.pop %v462
          %v464 = vmul.f32 %v452, 1.442695
          %v465 = vpow.pop %v464
          %v466 = vmul.f32 %v453, 1.442695
          %v467 = vpow.pop %v466
          %v468 = vmul.f32 %v454, 1.442695
          %v469 = vpow.pop %v468
          %v470 = vsub.f32 %v461, 1.0
          %v471 = vsub.f32 %v463, 1.0
          %v472 = vsub.f32 %v465, 1.0
          %v473 = vsub.f32 %v467, 1.0
          %v474 = vsub.f32 %v469, 1.0
          %v475 = vmul.f32 %v470, 1.6732632
          %v476 = vmul.f32 %v471, 1.6732632
          %v477 = vmul.f32 %v472, 1.6732632
          %v478 = vmul.f32 %v473, 1.6732632
          %v479 = vmul.f32 %v474, 1.6732632
          %v480 = vsel %vm455, %v450, %v475
          %v481 = vsel %vm456, %v451, %v476
          %v482 = vsel %vm457, %v452, %v477
          %v483 = vsel %vm458, %v453, %v478
          %v484 = vsel %vm459, %v454, %v479
          %v485 = vmul.f32 %v480, 1.050701
          %v486 = vmul.f32 %v481, 1.050701
          %v487 = vmul.f32 %v482, 1.050701
          %v488 = vmul.f32 %v483, 1.050701
          %v489 = vmul.f32 %v484, 1.050701
          %490 = vrot.lane.b32.xlu0 %v485, 64
          %v491 = vpop.permute.xlu0 %490
          %v492 = vsel %vm289, %v491, %v485
          %493 = vrot.lane.b32.xlu0 %v486, 64
          %v494 = vpop.permute.xlu0 %493
          %v495 = vsel %vm289, %v494, %v486
          %496 = vrot.lane.b32.xlu0 %v487, 64
          %v497 = vpop.permute.xlu0 %496
          %v498 = vsel %vm289, %v497, %v487
          %499 = vrot.lane.b32.xlu0 %v488, 64
          %v500 = vpop.permute.xlu0 %499
          %v501 = vsel %vm289, %v500, %v488
          %502 = vrot.lane.b32.xlu0 %v489, 64
          %v503 = vpop.permute.xlu0 %502
          %v504 = vsel %vm289, %v503, %v489
          %505 = vrot.lane.b32.xlu0 %v492, 64
          %v506 = vpop.permute.xlu0 %505
          %507 = vrot.lane.b32.xlu0 %v495, 64
          %v508 = vpop.permute.xlu0 %507
          %509 = vrot.lane.b32.xlu0 %v498, 64
          %v510 = vpop.permute.xlu0 %509
          %511 = vrot.lane.b32.xlu0 %v501, 64
          %v512 = vpop.permute.xlu0 %511
          %513 = vrot.lane.b32.xlu0 %v504, 64
          %v514 = vpop.permute.xlu0 %513
          %v515 = vsel %vm289, %v506, %v485
          %v516 = vsel %vm289, %v508, %v486
          %v517 = vsel %vm289, %v510, %v487
          %v518 = vsel %vm289, %v512, %v488
          %v519 = vsel %vm289, %v514, %v489
          %525 = vrot.lane.b32.xlu0 %v515, 65
          %v526 = vpop.permute.xlu0 %525
          %527 = vrot.lane.b32.xlu0 %v516, 65
          %v528 = vpop.permute.xlu0 %527
          %529 = vrot.lane.b32.xlu0 %v517, 65
          %v530 = vpop.permute.xlu0 %529
          %531 = vrot.lane.b32.xlu0 %v518, 65
          %v532 = vpop.permute.xlu0 %531
          %533 = vrot.lane.b32.xlu0 %v519, 65
          %v534 = vpop.permute.xlu0 %533
          %v540 = vsel %vm277, 0.0, %v526
          %v541 = vsel %vm277, 0.0, %v528
          %v542 = vsel %vm277, 0.0, %v530
          %v543 = vsel %vm277, 0.0, %v532
          %v544 = vsel %vm277, 0.0, %v534
          %545 = vrot.lane.b32.xlu0 %v515, 127
          %v546 = vpop.permute.xlu0 %545
          %547 = vrot.lane.b32.xlu0 %v516, 127
          %v548 = vpop.permute.xlu0 %547
          %549 = vrot.lane.b32.xlu0 %v517, 127
          %v550 = vpop.permute.xlu0 %549
          %551 = vrot.lane.b32.xlu0 %v518, 127
          %v552 = vpop.permute.xlu0 %551
          %553 = vrot.lane.b32.xlu0 %v519, 127
          %v554 = vpop.permute.xlu0 %553
          %v560 = vsel %vm278, 0.0, %v546
          %v561 = vsel %vm278, 0.0, %v548
          %v562 = vsel %vm278, 0.0, %v550
          %v563 = vsel %vm278, 0.0, %v552
          %v564 = vsel %vm278, 0.0, %v554
          %v565 = vld [vmem:[#allocation3] sm:$0xff]
          %v566 = vld [vmem:[#allocation3 + $0x8] sm:$0xff]
          %v567 = vld [vmem:[#allocation3 + $0x10] sm:$0xff]
          %v568 = vld [vmem:[#allocation3 + $0x18] sm:$0xff]
          %v569 = vld [vmem:[#allocation3 + $0x20] sm:$0xff]
          %v570 = vld [vmem:[#allocation3 + $0x28] sm:$0xff]
          %v571 = vld [vmem:[#allocation3 + $0x30] sm:$0xff]
          %v572 = vld [vmem:[#allocation3 + $0x38] sm:$0xff]
          %v573 = vld [vmem:[#allocation3 + $0x40] sm:$0xff]
          %v574 = vld [vmem:[#allocation3 + $0x48] sm:$0xff]
          %vm575 = vcmask 982016
          %v577 = vsel %vm575, %v565, 0
          %v580 = vsel %vm575, %v566, 0
          %v583 = vsel %vm575, %v567, 0
          %v586 = vsel %vm575, %v568, 0
          %v589 = vsel %vm575, %v569, 0
          %v592 = vsel %vm575, %v570, 0
          %v595 = vsel %vm575, %v571, 0
          %v598 = vsel %vm575, %v572, 0
          %v601 = vsel %vm575, %v573, 0
          %v604 = vsel %vm575, %v574, 0
          %606 = vmatpush.msra.mxu0 0.0
          %607 = vmatpush.msra.mxu0 %v564
          %608 = vmatpush.msra.mxu0 %v563
          %609 = vmatpush.msra.mxu0 %v562
          %610 = vmatpush.msra.mxu0 %v561
          %611 = vmatpush.msra.mxu0 %v560
          %612 = vmatpush.msra.mxu0 %v489
          %613 = vmatpush.msra.mxu0 %v488
          %614 = vmatpush.msra.mxu0 %v487
          %615 = vmatpush.msra.mxu0 %v486
          %616 = vmatpush.msra.mxu0 %v485
          %617 = vmatpush.msra.mxu0 %v544
          %618 = vmatpush.msra.mxu0 %v543
          %619 = vmatpush.msra.mxu0 %v542
          %620 = vmatpush.msra.mxu0 %v541
          %621 = vmatpush.msra.mxu0 %v540
          %622 = vmatmul.f32.gmra.mxu0 %v577
          %v623 = vpop.f32.mrf.mxu0
          %v624 = vadd.f32 0.0, %v623
          %625 = vmatmul.f32.gmra.mxu0 %v580
          %v626 = vpop.f32.mrf.mxu0
          %v627 = vadd.f32 0.0, %v626
          %628 = vmatmul.f32.gmra.mxu0 %v583
          %v629 = vpop.f32.mrf.mxu0
          %v630 = vadd.f32 0.0, %v629
          %631 = vmatmul.f32.gmra.mxu0 %v586
          %v632 = vpop.f32.mrf.mxu0
          %v633 = vadd.f32 0.0, %v632
          %634 = vmatmul.f32.gmra.mxu0 %v589
          %v635 = vpop.f32.mrf.mxu0
          %v636 = vadd.f32 0.0, %v635
          %637 = vmatmul.f32.gmra.mxu0 %v592
          %v638 = vpop.f32.mrf.mxu0
          %v639 = vadd.f32 0.0, %v638
          %640 = vmatmul.f32.gmra.mxu0 %v595
          %v641 = vpop.f32.mrf.mxu0
          %v642 = vadd.f32 0.0, %v641
          %643 = vmatmul.f32.gmra.mxu0 %v598
          %v644 = vpop.f32.mrf.mxu0
          %v645 = vadd.f32 0.0, %v644
          %646 = vmatmul.f32.gmra.mxu0 %v601
          %v647 = vpop.f32.mrf.mxu0
          %v648 = vadd.f32 0.0, %v647
          %649 = vmatmul.f32.gmra.mxu0 %v604
          %v650 = vpop.f32.mrf.mxu0
          %v651 = vadd.f32 0.0, %v650
          %652 = vdwg.mxu0
          %vm653 = vcmask 523264
          %654 = vst.msk [vmem:[%s5] sm:$0xff] %vm653, %v624
          %655 = vst.msk [vmem:[%s5 + $0x8] sm:$0xff] %vm653, %v627
          %656 = vst.msk [vmem:[%s5 + $0x10] sm:$0xff] %vm653, %v630
          %657 = vst.msk [vmem:[%s5 + $0x18] sm:$0xff] %vm653, %v633
          %658 = vst.msk [vmem:[%s5 + $0x20] sm:$0xff] %vm653, %v636
          %659 = vst.msk [vmem:[%s5 + $0x28] sm:$0xff] %vm653, %v639
          %660 = vst.msk [vmem:[%s5 + $0x30] sm:$0xff] %vm653, %v642
          %661 = vst.msk [vmem:[%s5 + $0x38] sm:$0xff] %vm653, %v645
          %662 = vst.msk [vmem:[%s5 + $0x40] sm:$0xff] %vm653, %v648
          %663 = vst.msk [vmem:[%s5 + $0x48] sm:$0xff] %vm653, %v651
          %674 = vrot.lane.b32.xlu0 %v624, 112
          %v675 = vpop.permute.xlu0 %674
          %676 = vrot.lane.b32.xlu0 %v627, 112
          %v677 = vpop.permute.xlu0 %676
          %678 = vrot.lane.b32.xlu0 %v630, 112
          %v679 = vpop.permute.xlu0 %678
          %680 = vrot.lane.b32.xlu0 %v633, 112
          %v681 = vpop.permute.xlu0 %680
          %682 = vrot.lane.b32.xlu0 %v636, 112
          %v683 = vpop.permute.xlu0 %682
          %684 = vrot.lane.b32.xlu0 %v639, 112
          %v685 = vpop.permute.xlu0 %684
          %686 = vrot.lane.b32.xlu0 %v642, 112
          %v687 = vpop.permute.xlu0 %686
          %688 = vrot.lane.b32.xlu0 %v645, 112
          %v689 = vpop.permute.xlu0 %688
          %690 = vrot.lane.b32.xlu0 %v648, 112
          %v691 = vpop.permute.xlu0 %690
          %692 = vrot.lane.b32.xlu0 %v651, 112
          %v693 = vpop.permute.xlu0 %692
          %704 = vrot.lane.b32.xlu0 %v624, 96
          %v705 = vpop.permute.xlu0 %704
          %706 = vrot.lane.b32.xlu0 %v627, 96
          %v707 = vpop.permute.xlu0 %706
          %708 = vrot.lane.b32.xlu0 %v630, 96
          %v709 = vpop.permute.xlu0 %708
          %710 = vrot.lane.b32.xlu0 %v633, 96
          %v711 = vpop.permute.xlu0 %710
          %712 = vrot.lane.b32.xlu0 %v636, 96
          %v713 = vpop.permute.xlu0 %712
          %714 = vrot.lane.b32.xlu0 %v639, 96
          %v715 = vpop.permute.xlu0 %714
          %716 = vrot.lane.b32.xlu0 %v642, 96
          %v717 = vpop.permute.xlu0 %716
          %718 = vrot.lane.b32.xlu0 %v645, 96
          %v719 = vpop.permute.xlu0 %718
          %720 = vrot.lane.b32.xlu0 %v648, 96
          %v721 = vpop.permute.xlu0 %720
          %722 = vrot.lane.b32.xlu0 %v651, 96
          %v723 = vpop.permute.xlu0 %722
          %734 = vrot.lane.b32.xlu0 %v624, 80
          %v735 = vpop.permute.xlu0 %734
          %736 = vrot.lane.b32.xlu0 %v627, 80
          %v737 = vpop.permute.xlu0 %736
          %738 = vrot.lane.b32.xlu0 %v630, 80
          %v739 = vpop.permute.xlu0 %738
          %740 = vrot.lane.b32.xlu0 %v633, 80
          %v741 = vpop.permute.xlu0 %740
          %742 = vrot.lane.b32.xlu0 %v636, 80
          %v743 = vpop.permute.xlu0 %742
          %744 = vrot.lane.b32.xlu0 %v639, 80
          %v745 = vpop.permute.xlu0 %744
          %746 = vrot.lane.b32.xlu0 %v642, 80
          %v747 = vpop.permute.xlu0 %746
          %748 = vrot.lane.b32.xlu0 %v645, 80
          %v749 = vpop.permute.xlu0 %748
          %750 = vrot.lane.b32.xlu0 %v648, 80
          %v751 = vpop.permute.xlu0 %750
          %752 = vrot.lane.b32.xlu0 %v651, 80
          %v753 = vpop.permute.xlu0 %752
          %v764 = vrot.slane %v705, 4
          %vm765 = vcmask 1047556
          %v766 = vsel %vm765, %v764, %v624
          %v767 = vrot.slane %v624, 4
          %v768 = vsel %vm765, %v705, %v767
          %v770 = vunpack.c.l.s4 1983009808
          %v771 = vunpack.c.0.s8 %v770
          %v772 = vperm.slane %v766, %v771
          %v774 = vunpack.c.l.s4 1983009808
          %v775 = vunpack.c.0.s8 %v774
          %v776 = vperm.slane %v768, %v775
          %v777 = vrot.slane %v735, 4
          %v778 = vsel %vm765, %v777, %v675
          %v779 = vrot.slane %v675, 4
          %v780 = vsel %vm765, %v735, %v779
          %v782 = vunpack.c.l.s4 1983009808
          %v783 = vunpack.c.0.s8 %v782
          %v784 = vperm.slane %v778, %v783
          %v786 = vunpack.c.l.s4 1983009808
          %v787 = vunpack.c.0.s8 %v786
          %v788 = vperm.slane %v780, %v787
          %v789 = vrot.slane %v784, 4
          %v790 = vsel %vm765, %v789, %v772
          %v791 = vrot.slane %v772, 4
          %v792 = vsel %vm765, %v784, %v791
          %v794 = vunpack.c.l.s4 1934713408
          %v795 = vunpack.c.0.s8 %v794
          %v796 = vperm.slane %v790, %v795
          %v798 = vunpack.c.l.s4 1934713408
          %v799 = vunpack.c.0.s8 %v798
          %v800 = vperm.slane %v792, %v799
          %v801 = vrot.slane %v788, 4
          %v802 = vsel %vm765, %v801, %v776
          %v803 = vrot.slane %v776, 4
          %v804 = vsel %vm765, %v788, %v803
          %v806 = vunpack.c.l.s4 1934713408
          %v807 = vunpack.c.0.s8 %v806
          %v808 = vperm.slane %v802, %v807
          %v810 = vunpack.c.l.s4 1934713408
          %v811 = vunpack.c.0.s8 %v810
          %v812 = vperm.slane %v804, %v811
          %v813 = vrot.slane %v796, 4
          %v814 = vsel %vm765, 0.0, %v813
          %v815 = vrot.slane %v800, 4
          %v816 = vsel %vm765, 0.0, %v815
          %v817 = vrot.slane %v808, 4
          %v818 = vsel %vm765, 0.0, %v817
          %v819 = vrot.slane %v812, 4
          %v820 = vsel %vm765, 0.0, %v819
          %v821 = vrot.slane %v707, 4
          %v822 = vsel %vm765, %v821, %v627
          %v823 = vrot.slane %v627, 4
          %v824 = vsel %vm765, %v707, %v823
          %v826 = vunpack.c.l.s4 1983009808
          %v827 = vunpack.c.0.s8 %v826
          %v828 = vperm.slane %v822, %v827
          %v830 = vunpack.c.l.s4 1983009808
          %v831 = vunpack.c.0.s8 %v830
          %v832 = vperm.slane %v824, %v831
          %v833 = vrot.slane %v737, 4
          %v834 = vsel %vm765, %v833, %v677
          %v835 = vrot.slane %v677, 4
          %v836 = vsel %vm765, %v737, %v835
          %v838 = vunpack.c.l.s4 1983009808
          %v839 = vunpack.c.0.s8 %v838
          %v840 = vperm.slane %v834, %v839
          %v842 = vunpack.c.l.s4 1983009808
          %v843 = vunpack.c.0.s8 %v842
          %v844 = vperm.slane %v836, %v843
          %v845 = vrot.slane %v840, 4
          %v846 = vsel %vm765, %v845, %v828
          %v847 = vrot.slane %v828, 4
          %v848 = vsel %vm765, %v840, %v847
          %v850 = vunpack.c.l.s4 1934713408
          %v851 = vunpack.c.0.s8 %v850
          %v852 = vperm.slane %v846, %v851
          %v854 = vunpack.c.l.s4 1934713408
          %v855 = vunpack.c.0.s8 %v854
          %v856 = vperm.slane %v848, %v855
          %v857 = vrot.slane %v844, 4
          %v858 = vsel %vm765, %v857, %v832
          %v859 = vrot.slane %v832, 4
          %v860 = vsel %vm765, %v844, %v859
          %v862 = vunpack.c.l.s4 1934713408
          %v863 = vunpack.c.0.s8 %v862
          %v864 = vperm.slane %v858, %v863
          %v866 = vunpack.c.l.s4 1934713408
          %v867 = vunpack.c.0.s8 %v866
          %v868 = vperm.slane %v860, %v867
          %v869 = vrot.slane %v852, 4
          %v870 = vsel %vm765, 0.0, %v869
          %v871 = vrot.slane %v856, 4
          %v872 = vsel %vm765, 0.0, %v871
          %v873 = vrot.slane %v864, 4
          %v874 = vsel %vm765, 0.0, %v873
          %v875 = vrot.slane %v868, 4
          %v876 = vsel %vm765, 0.0, %v875
          %v877 = vrot.slane %v709, 4
          %v878 = vsel %vm765, %v877, %v630
          %v879 = vrot.slane %v630, 4
          %v880 = vsel %vm765, %v709, %v879
          %v882 = vunpack.c.l.s4 1983009808
          %v883 = vunpack.c.0.s8 %v882
          %v884 = vperm.slane %v878, %v883
          %v886 = vunpack.c.l.s4 1983009808
          %v887 = vunpack.c.0.s8 %v886
          %v888 = vperm.slane %v880, %v887
          %v889 = vrot.slane %v739, 4
          %v890 = vsel %vm765, %v889, %v679
          %v891 = vrot.slane %v679, 4
          %v892 = vsel %vm765, %v739, %v891
          %v894 = vunpack.c.l.s4 1983009808
          %v895 = vunpack.c.0.s8 %v894
          %v896 = vperm.slane %v890, %v895
          %v898 = vunpack.c.l.s4 1983009808
          %v899 = vunpack.c.0.s8 %v898
          %v900 = vperm.slane %v892, %v899
          %v901 = vrot.slane %v896, 4
          %v902 = vsel %vm765, %v901, %v884
          %v903 = vrot.slane %v884, 4
          %v904 = vsel %vm765, %v896, %v903
          %v906 = vunpack.c.l.s4 1934713408
          %v907 = vunpack.c.0.s8 %v906
          %v908 = vperm.slane %v902, %v907
          %v910 = vunpack.c.l.s4 1934713408
          %v911 = vunpack.c.0.s8 %v910
          %v912 = vperm.slane %v904, %v911
          %v913 = vrot.slane %v900, 4
          %v914 = vsel %vm765, %v913, %v888
          %v915 = vrot.slane %v888, 4
          %v916 = vsel %vm765, %v900, %v915
          %v918 = vunpack.c.l.s4 1934713408
          %v919 = vunpack.c.0.s8 %v918
          %v920 = vperm.slane %v914, %v919
          %v922 = vunpack.c.l.s4 1934713408
          %v923 = vunpack.c.0.s8 %v922
          %v924 = vperm.slane %v916, %v923
          %v925 = vrot.slane %v908, 4
          %v926 = vsel %vm765, 0.0, %v925
          %v927 = vrot.slane %v912, 4
          %v928 = vsel %vm765, 0.0, %v927
          %v929 = vrot.slane %v920, 4
          %v930 = vsel %vm765, 0.0, %v929
          %v931 = vrot.slane %v924, 4
          %v932 = vsel %vm765, 0.0, %v931
          %v933 = vrot.slane %v711, 4
          %v934 = vsel %vm765, %v933, %v633
          %v935 = vrot.slane %v633, 4
          %v936 = vsel %vm765, %v711, %v935
          %v938 = vunpack.c.l.s4 1983009808
          %v939 = vunpack.c.0.s8 %v938
          %v940 = vperm.slane %v934, %v939
          %v942 = vunpack.c.l.s4 1983009808
          %v943 = vunpack.c.0.s8 %v942
          %v944 = vperm.slane %v936, %v943
          %v945 = vrot.slane %v741, 4
          %v946 = vsel %vm765, %v945, %v681
          %v947 = vrot.slane %v681, 4
          %v948 = vsel %vm765, %v741, %v947
          %v950 = vunpack.c.l.s4 1983009808
          %v951 = vunpack.c.0.s8 %v950
          %v952 = vperm.slane %v946, %v951
          %v954 = vunpack.c.l.s4 1983009808
          %v955 = vunpack.c.0.s8 %v954
          %v956 = vperm.slane %v948, %v955
          %v957 = vrot.slane %v952, 4
          %v958 = vsel %vm765, %v957, %v940
          %v959 = vrot.slane %v940, 4
          %v960 = vsel %vm765, %v952, %v959
          %v962 = vunpack.c.l.s4 1934713408
          %v963 = vunpack.c.0.s8 %v962
          %v964 = vperm.slane %v958, %v963
          %v966 = vunpack.c.l.s4 1934713408
          %v967 = vunpack.c.0.s8 %v966
          %v968 = vperm.slane %v960, %v967
          %v969 = vrot.slane %v956, 4
          %v970 = vsel %vm765, %v969, %v944
          %v971 = vrot.slane %v944, 4
          %v972 = vsel %vm765, %v956, %v971
          %v974 = vunpack.c.l.s4 1934713408
          %v975 = vunpack.c.0.s8 %v974
          %v976 = vperm.slane %v970, %v975
          %v978 = vunpack.c.l.s4 1934713408
          %v979 = vunpack.c.0.s8 %v978
          %v980 = vperm.slane %v972, %v979
          %v981 = vrot.slane %v964, 4
          %v982 = vsel %vm765, 0.0, %v981
          %v983 = vrot.slane %v968, 4
          %v984 = vsel %vm765, 0.0, %v983
          %v985 = vrot.slane %v976, 4
          %v986 = vsel %vm765, 0.0, %v985
          %v987 = vrot.slane %v980, 4
          %v988 = vsel %vm765, 0.0, %v987
          %v989 = vrot.slane %v713, 4
          %v990 = vsel %vm765, %v989, %v636
          %v991 = vrot.slane %v636, 4
          %v992 = vsel %vm765, %v713, %v991
          %v994 = vunpack.c.l.s4 1983009808
          %v995 = vunpack.c.0.s8 %v994
          %v996 = vperm.slane %v990, %v995
          %v998 = vunpack.c.l.s4 1983009808
          %v999 = vunpack.c.0.s8 %v998
          %v1000 = vperm.slane %v992, %v999
          %v1001 = vrot.slane %v743, 4
          %v1002 = vsel %vm765, %v1001, %v683
          %v1003 = vrot.slane %v683, 4
          %v1004 = vsel %vm765, %v743, %v1003
          %v1006 = vunpack.c.l.s4 1983009808
          %v1007 = vunpack.c.0.s8 %v1006
          %v1008 = vperm.slane %v1002, %v1007
          %v1010 = vunpack.c.l.s4 1983009808
          %v1011 = vunpack.c.0.s8 %v1010
          %v1012 = vperm.slane %v1004, %v1011
          %v1013 = vrot.slane %v1008, 4
          %v1014 = vsel %vm765, %v1013, %v996
          %v1015 = vrot.slane %v996, 4
          %v1016 = vsel %vm765, %v1008, %v1015
          %v1018 = vunpack.c.l.s4 1934713408
          %v1019 = vunpack.c.0.s8 %v1018
          %v1020 = vperm.slane %v1014, %v1019
          %v1022 = vunpack.c.l.s4 1934713408
          %v1023 = vunpack.c.0.s8 %v1022
          %v1024 = vperm.slane %v1016, %v1023
          %v1025 = vrot.slane %v1012, 4
          %v1026 = vsel %vm765, %v1025, %v1000
          %v1027 = vrot.slane %v1000, 4
          %v1028 = vsel %vm765, %v1012, %v1027
          %v1030 = vunpack.c.l.s4 1934713408
          %v1031 = vunpack.c.0.s8 %v1030
          %v1032 = vperm.slane %v1026, %v1031
          %v1034 = vunpack.c.l.s4 1934713408
          %v1035 = vunpack.c.0.s8 %v1034
          %v1036 = vperm.slane %v1028, %v1035
          %v1037 = vrot.slane %v1020, 4
          %v1038 = vsel %vm765, 0.0, %v1037
          %v1039 = vrot.slane %v1024, 4
          %v1040 = vsel %vm765, 0.0, %v1039
          %v1041 = vrot.slane %v1032, 4
          %v1042 = vsel %vm765, 0.0, %v1041
          %v1043 = vrot.slane %v1036, 4
          %v1044 = vsel %vm765, 0.0, %v1043
          %v1045 = vrot.slane %v715, 4
          %v1046 = vsel %vm765, %v1045, %v639
          %v1047 = vrot.slane %v639, 4
          %v1048 = vsel %vm765, %v715, %v1047
          %v1050 = vunpack.c.l.s4 1983009808
          %v1051 = vunpack.c.0.s8 %v1050
          %v1052 = vperm.slane %v1046, %v1051
          %v1054 = vunpack.c.l.s4 1983009808
          %v1055 = vunpack.c.0.s8 %v1054
          %v1056 = vperm.slane %v1048, %v1055
          %v1057 = vrot.slane %v745, 4
          %v1058 = vsel %vm765, %v1057, %v685
          %v1059 = vrot.slane %v685, 4
          %v1060 = vsel %vm765, %v745, %v1059
          %v1062 = vunpack.c.l.s4 1983009808
          %v1063 = vunpack.c.0.s8 %v1062
          %v1064 = vperm.slane %v1058, %v1063
          %v1066 = vunpack.c.l.s4 1983009808
          %v1067 = vunpack.c.0.s8 %v1066
          %v1068 = vperm.slane %v1060, %v1067
          %v1069 = vrot.slane %v1064, 4
          %v1070 = vsel %vm765, %v1069, %v1052
          %v1071 = vrot.slane %v1052, 4
          %v1072 = vsel %vm765, %v1064, %v1071
          %v1074 = vunpack.c.l.s4 1934713408
          %v1075 = vunpack.c.0.s8 %v1074
          %v1076 = vperm.slane %v1070, %v1075
          %v1078 = vunpack.c.l.s4 1934713408
          %v1079 = vunpack.c.0.s8 %v1078
          %v1080 = vperm.slane %v1072, %v1079
          %v1081 = vrot.slane %v1068, 4
          %v1082 = vsel %vm765, %v1081, %v1056
          %v1083 = vrot.slane %v1056, 4
          %v1084 = vsel %vm765, %v1068, %v1083
          %v1086 = vunpack.c.l.s4 1934713408
          %v1087 = vunpack.c.0.s8 %v1086
          %v1088 = vperm.slane %v1082, %v1087
          %v1090 = vunpack.c.l.s4 1934713408
          %v1091 = vunpack.c.0.s8 %v1090
          %v1092 = vperm.slane %v1084, %v1091
          %v1093 = vrot.slane %v1076, 4
          %v1094 = vsel %vm765, 0.0, %v1093
          %v1095 = vrot.slane %v1080, 4
          %v1096 = vsel %vm765, 0.0, %v1095
          %v1097 = vrot.slane %v1088, 4
          %v1098 = vsel %vm765, 0.0, %v1097
          %v1099 = vrot.slane %v1092, 4
          %v1100 = vsel %vm765, 0.0, %v1099
          %v1101 = vrot.slane %v717, 4
          %v1102 = vsel %vm765, %v1101, %v642
          %v1103 = vrot.slane %v642, 4
          %v1104 = vsel %vm765, %v717, %v1103
          %v1106 = vunpack.c.l.s4 1983009808
          %v1107 = vunpack.c.0.s8 %v1106
          %v1108 = vperm.slane %v1102, %v1107
          %v1110 = vunpack.c.l.s4 1983009808
          %v1111 = vunpack.c.0.s8 %v1110
          %v1112 = vperm.slane %v1104, %v1111
          %v1113 = vrot.slane %v747, 4
          %v1114 = vsel %vm765, %v1113, %v687
          %v1115 = vrot.slane %v687, 4
          %v1116 = vsel %vm765, %v747, %v1115
          %v1118 = vunpack.c.l.s4 1983009808
          %v1119 = vunpack.c.0.s8 %v1118
          %v1120 = vperm.slane %v1114, %v1119
          %v1122 = vunpack.c.l.s4 1983009808
          %v1123 = vunpack.c.0.s8 %v1122
          %v1124 = vperm.slane %v1116, %v1123
          %v1125 = vrot.slane %v1120, 4
          %v1126 = vsel %vm765, %v1125, %v1108
          %v1127 = vrot.slane %v1108, 4
          %v1128 = vsel %vm765, %v1120, %v1127
          %v1130 = vunpack.c.l.s4 1934713408
          %v1131 = vunpack.c.0.s8 %v1130
          %v1132 = vperm.slane %v1126, %v1131
          %v1134 = vunpack.c.l.s4 1934713408
          %v1135 = vunpack.c.0.s8 %v1134
          %v1136 = vperm.slane %v1128, %v1135
          %v1137 = vrot.slane %v1124, 4
          %v1138 = vsel %vm765, %v1137, %v1112
          %v1139 = vrot.slane %v1112, 4
          %v1140 = vsel %vm765, %v1124, %v1139
          %v1142 = vunpack.c.l.s4 1934713408
          %v1143 = vunpack.c.0.s8 %v1142
          %v1144 = vperm.slane %v1138, %v1143
          %v1146 = vunpack.c.l.s4 1934713408
          %v1147 = vunpack.c.0.s8 %v1146
          %v1148 = vperm.slane %v1140, %v1147
          %v1149 = vrot.slane %v1132, 4
          %v1150 = vsel %vm765, 0.0, %v1149
          %v1151 = vrot.slane %v1136, 4
          %v1152 = vsel %vm765, 0.0, %v1151
          %v1153 = vrot.slane %v1144, 4
          %v1154 = vsel %vm765, 0.0, %v1153
          %v1155 = vrot.slane %v1148, 4
          %v1156 = vsel %vm765, 0.0, %v1155
          %v1157 = vrot.slane %v719, 4
          %v1158 = vsel %vm765, %v1157, %v645
          %v1159 = vrot.slane %v645, 4
          %v1160 = vsel %vm765, %v719, %v1159
          %v1162 = vunpack.c.l.s4 1983009808
          %v1163 = vunpack.c.0.s8 %v1162
          %v1164 = vperm.slane %v1158, %v1163
          %v1166 = vunpack.c.l.s4 1983009808
          %v1167 = vunpack.c.0.s8 %v1166
          %v1168 = vperm.slane %v1160, %v1167
          %v1169 = vrot.slane %v749, 4
          %v1170 = vsel %vm765, %v1169, %v689
          %v1171 = vrot.slane %v689, 4
          %v1172 = vsel %vm765, %v749, %v1171
          %v1174 = vunpack.c.l.s4 1983009808
          %v1175 = vunpack.c.0.s8 %v1174
          %v1176 = vperm.slane %v1170, %v1175
          %v1178 = vunpack.c.l.s4 1983009808
          %v1179 = vunpack.c.0.s8 %v1178
          %v1180 = vperm.slane %v1172, %v1179
          %v1181 = vrot.slane %v1176, 4
          %v1182 = vsel %vm765, %v1181, %v1164
          %v1183 = vrot.slane %v1164, 4
          %v1184 = vsel %vm765, %v1176, %v1183
          %v1186 = vunpack.c.l.s4 1934713408
          %v1187 = vunpack.c.0.s8 %v1186
          %v1188 = vperm.slane %v1182, %v1187
          %v1190 = vunpack.c.l.s4 1934713408
          %v1191 = vunpack.c.0.s8 %v1190
          %v1192 = vperm.slane %v1184, %v1191
          %v1193 = vrot.slane %v1180, 4
          %v1194 = vsel %vm765, %v1193, %v1168
          %v1195 = vrot.slane %v1168, 4
          %v1196 = vsel %vm765, %v1180, %v1195
          %v1198 = vunpack.c.l.s4 1934713408
          %v1199 = vunpack.c.0.s8 %v1198
          %v1200 = vperm.slane %v1194, %v1199
          %v1202 = vunpack.c.l.s4 1934713408
          %v1203 = vunpack.c.0.s8 %v1202
          %v1204 = vperm.slane %v1196, %v1203
          %v1205 = vrot.slane %v1188, 4
          %v1206 = vsel %vm765, 0.0, %v1205
          %v1207 = vrot.slane %v1192, 4
          %v1208 = vsel %vm765, 0.0, %v1207
          %v1209 = vrot.slane %v1200, 4
          %v1210 = vsel %vm765, 0.0, %v1209
          %v1211 = vrot.slane %v1204, 4
          %v1212 = vsel %vm765, 0.0, %v1211
          %v1213 = vrot.slane %v721, 4
          %v1214 = vsel %vm765, %v1213, %v648
          %v1215 = vrot.slane %v648, 4
          %v1216 = vsel %vm765, %v721, %v1215
          %v1218 = vunpack.c.l.s4 1983009808
          %v1219 = vunpack.c.0.s8 %v1218
          %v1220 = vperm.slane %v1214, %v1219
          %v1222 = vunpack.c.l.s4 1983009808
          %v1223 = vunpack.c.0.s8 %v1222
          %v1224 = vperm.slane %v1216, %v1223
          %v1225 = vrot.slane %v751, 4
          %v1226 = vsel %vm765, %v1225, %v691
          %v1227 = vrot.slane %v691, 4
          %v1228 = vsel %vm765, %v751, %v1227
          %v1230 = vunpack.c.l.s4 1983009808
          %v1231 = vunpack.c.0.s8 %v1230
          %v1232 = vperm.slane %v1226, %v1231
          %v1234 = vunpack.c.l.s4 1983009808
          %v1235 = vunpack.c.0.s8 %v1234
          %v1236 = vperm.slane %v1228, %v1235
          %v1237 = vrot.slane %v1232, 4
          %v1238 = vsel %vm765, %v1237, %v1220
          %v1239 = vrot.slane %v1220, 4
          %v1240 = vsel %vm765, %v1232, %v1239
          %v1242 = vunpack.c.l.s4 1934713408
          %v1243 = vunpack.c.0.s8 %v1242
          %v1244 = vperm.slane %v1238, %v1243
          %v1246 = vunpack.c.l.s4 1934713408
          %v1247 = vunpack.c.0.s8 %v1246
          %v1248 = vperm.slane %v1240, %v1247
          %v1249 = vrot.slane %v1236, 4
          %v1250 = vsel %vm765, %v1249, %v1224
          %v1251 = vrot.slane %v1224, 4
          %v1252 = vsel %vm765, %v1236, %v1251
          %v1254 = vunpack.c.l.s4 1934713408
          %v1255 = vunpack.c.0.s8 %v1254
          %v1256 = vperm.slane %v1250, %v1255
          %v1258 = vunpack.c.l.s4 1934713408
          %v1259 = vunpack.c.0.s8 %v1258
          %v1260 = vperm.slane %v1252, %v1259
          %v1261 = vrot.slane %v1244, 4
          %v1262 = vsel %vm765, 0.0, %v1261
          %v1263 = vrot.slane %v1248, 4
          %v1264 = vsel %vm765, 0.0, %v1263
          %v1265 = vrot.slane %v1256, 4
          %v1266 = vsel %vm765, 0.0, %v1265
          %v1267 = vrot.slane %v1260, 4
          %v1268 = vsel %vm765, 0.0, %v1267
          %v1269 = vrot.slane %v723, 4
          %v1270 = vsel %vm765, %v1269, %v651
          %v1271 = vrot.slane %v651, 4
          %v1272 = vsel %vm765, %v723, %v1271
          %v1274 = vunpack.c.l.s4 1983009808
          %v1275 = vunpack.c.0.s8 %v1274
          %v1276 = vperm.slane %v1270, %v1275
          %v1278 = vunpack.c.l.s4 1983009808
          %v1279 = vunpack.c.0.s8 %v1278
          %v1280 = vperm.slane %v1272, %v1279
          %v1281 = vrot.slane %v753, 4
          %v1282 = vsel %vm765, %v1281, %v693
          %v1283 = vrot.slane %v693, 4
          %v1284 = vsel %vm765, %v753, %v1283
          %v1286 = vunpack.c.l.s4 1983009808
          %v1287 = vunpack.c.0.s8 %v1286
          %v1288 = vperm.slane %v1282, %v1287
          %v1290 = vunpack.c.l.s4 1983009808
          %v1291 = vunpack.c.0.s8 %v1290
          %v1292 = vperm.slane %v1284, %v1291
          %v1293 = vrot.slane %v1288, 4
          %v1294 = vsel %vm765, %v1293, %v1276
          %v1295 = vrot.slane %v1276, 4
          %v1296 = vsel %vm765, %v1288, %v1295
          %v1298 = vunpack.c.l.s4 1934713408
          %v1299 = vunpack.c.0.s8 %v1298
          %v1300 = vperm.slane %v1294, %v1299
          %v1302 = vunpack.c.l.s4 1934713408
          %v1303 = vunpack.c.0.s8 %v1302
          %v1304 = vperm.slane %v1296, %v1303
          %v1305 = vrot.slane %v1292, 4
          %v1306 = vsel %vm765, %v1305, %v1280
          %v1307 = vrot.slane %v1280, 4
          %v1308 = vsel %vm765, %v1292, %v1307
          %v1310 = vunpack.c.l.s4 1934713408
          %v1311 = vunpack.c.0.s8 %v1310
          %v1312 = vperm.slane %v1306, %v1311
          %v1314 = vunpack.c.l.s4 1934713408
          %v1315 = vunpack.c.0.s8 %v1314
          %v1316 = vperm.slane %v1308, %v1315
          %v1317 = vrot.slane %v1300, 4
          %v1318 = vsel %vm765, 0.0, %v1317
          %v1319 = vrot.slane %v1304, 4
          %v1320 = vsel %vm765, 0.0, %v1319
          %v1321 = vrot.slane %v1312, 4
          %v1322 = vsel %vm765, 0.0, %v1321
          %v1323 = vrot.slane %v1316, 4
          %v1324 = vsel %vm765, 0.0, %v1323
          %v1325 = vsel %vm765, %v815, %v796
          %v1327 = vunpack.c.l.s4 1983009808
          %v1328 = vunpack.c.0.s8 %v1327
          %v1329 = vperm.slane %v1325, %v1328
          %v1330 = vrot.slane %v816, 4
          %v1331 = vsel %vm765, %v1330, %v814
          %v1333 = vunpack.c.l.s4 1983009808
          %v1334 = vunpack.c.0.s8 %v1333
          %v1335 = vperm.slane %v1331, %v1334
          %v1336 = vsel %vm765, %v819, %v808
          %v1338 = vunpack.c.l.s4 1983009808
          %v1339 = vunpack.c.0.s8 %v1338
          %v1340 = vperm.slane %v1336, %v1339
          %v1341 = vrot.slane %v820, 4
          %v1342 = vsel %vm765, %v1341, %v818
          %v1344 = vunpack.c.l.s4 1983009808
          %v1345 = vunpack.c.0.s8 %v1344
          %v1346 = vperm.slane %v1342, %v1345
          %v1347 = vrot.slane %v1335, 4
          %v1348 = vsel %vm765, %v1347, %v1329
          %v1349 = vrot.slane %v1329, 4
          %v1350 = vsel %vm765, %v1335, %v1349
          %v1352 = vunpack.c.l.s4 1934713408
          %v1353 = vunpack.c.0.s8 %v1352
          %v1354 = vperm.slane %v1348, %v1353
          %v1356 = vunpack.c.l.s4 1934713408
          %v1357 = vunpack.c.0.s8 %v1356
          %v1358 = vperm.slane %v1350, %v1357
          %v1359 = vrot.slane %v1346, 4
          %v1360 = vsel %vm765, %v1359, %v1340
          %v1361 = vrot.slane %v1340, 4
          %v1362 = vsel %vm765, %v1346, %v1361
          %v1364 = vunpack.c.l.s4 1934713408
          %v1365 = vunpack.c.0.s8 %v1364
          %v1366 = vperm.slane %v1360, %v1365
          %v1368 = vunpack.c.l.s4 1934713408
          %v1369 = vunpack.c.0.s8 %v1368
          %v1370 = vperm.slane %v1362, %v1369
          %v1371 = vrot.slane %v1366, 4
          %v1372 = vsel %vm765, %v1371, %v1354
          %v1373 = vrot.slane %v1354, 4
          %v1374 = vsel %vm765, %v1366, %v1373
          %v1375 = vrot.slane %v1370, 4
          %v1376 = vsel %vm765, %v1375, %v1358
          %v1377 = vrot.slane %v1358, 4
          %v1378 = vsel %vm765, %v1370, %v1377
          %v1379 = vsel %vm765, %v871, %v852
          %v1381 = vunpack.c.l.s4 1983009808
          %v1382 = vunpack.c.0.s8 %v1381
          %v1383 = vperm.slane %v1379, %v1382
          %v1384 = vrot.slane %v872, 4
          %v1385 = vsel %vm765, %v1384, %v870
          %v1387 = vunpack.c.l.s4 1983009808
          %v1388 = vunpack.c.0.s8 %v1387
          %v1389 = vperm.slane %v1385, %v1388
          %v1390 = vsel %vm765, %v875, %v864
          %v1392 = vunpack.c.l.s4 1983009808
          %v1393 = vunpack.c.0.s8 %v1392
          %v1394 = vperm.slane %v1390, %v1393
          %v1395 = vrot.slane %v876, 4
          %v1396 = vsel %vm765, %v1395, %v874
          %v1398 = vunpack.c.l.s4 1983009808
          %v1399 = vunpack.c.0.s8 %v1398
          %v1400 = vperm.slane %v1396, %v1399
          %v1401 = vrot.slane %v1389, 4
          %v1402 = vsel %vm765, %v1401, %v1383
          %v1403 = vrot.slane %v1383, 4
          %v1404 = vsel %vm765, %v1389, %v1403
          %v1406 = vunpack.c.l.s4 1934713408
          %v1407 = vunpack.c.0.s8 %v1406
          %v1408 = vperm.slane %v1402, %v1407
          %v1410 = vunpack.c.l.s4 1934713408
          %v1411 = vunpack.c.0.s8 %v1410
          %v1412 = vperm.slane %v1404, %v1411
          %v1413 = vrot.slane %v1400, 4
          %v1414 = vsel %vm765, %v1413, %v1394
          %v1415 = vrot.slane %v1394, 4
          %v1416 = vsel %vm765, %v1400, %v1415
          %v1418 = vunpack.c.l.s4 1934713408
          %v1419 = vunpack.c.0.s8 %v1418
          %v1420 = vperm.slane %v1414, %v1419
          %v1422 = vunpack.c.l.s4 1934713408
          %v1423 = vunpack.c.0.s8 %v1422
          %v1424 = vperm.slane %v1416, %v1423
          %v1425 = vrot.slane %v1420, 4
          %v1426 = vsel %vm765, %v1425, %v1408
          %v1427 = vrot.slane %v1408, 4
          %v1428 = vsel %vm765, %v1420, %v1427
          %v1429 = vrot.slane %v1424, 4
          %v1430 = vsel %vm765, %v1429, %v1412
          %v1431 = vrot.slane %v1412, 4
          %v1432 = vsel %vm765, %v1424, %v1431
          %v1433 = vsel %vm765, %v927, %v908
          %v1435 = vunpack.c.l.s4 1983009808
          %v1436 = vunpack.c.0.s8 %v1435
          %v1437 = vperm.slane %v1433, %v1436
          %v1438 = vrot.slane %v928, 4
          %v1439 = vsel %vm765, %v1438, %v926
          %v1441 = vunpack.c.l.s4 1983009808
          %v1442 = vunpack.c.0.s8 %v1441
          %v1443 = vperm.slane %v1439, %v1442
          %v1444 = vsel %vm765, %v931, %v920
          %v1446 = vunpack.c.l.s4 1983009808
          %v1447 = vunpack.c.0.s8 %v1446
          %v1448 = vperm.slane %v1444, %v1447
          %v1449 = vrot.slane %v932, 4
          %v1450 = vsel %vm765, %v1449, %v930
          %v1452 = vunpack.c.l.s4 1983009808
          %v1453 = vunpack.c.0.s8 %v1452
          %v1454 = vperm.slane %v1450, %v1453
          %v1455 = vrot.slane %v1443, 4
          %v1456 = vsel %vm765, %v1455, %v1437
          %v1457 = vrot.slane %v1437, 4
          %v1458 = vsel %vm765, %v1443, %v1457
          %v1460 = vunpack.c.l.s4 1934713408
          %v1461 = vunpack.c.0.s8 %v1460
          %v1462 = vperm.slane %v1456, %v1461
          %v1464 = vunpack.c.l.s4 1934713408
          %v1465 = vunpack.c.0.s8 %v1464
          %v1466 = vperm.slane %v1458, %v1465
          %v1467 = vrot.slane %v1454, 4
          %v1468 = vsel %vm765, %v1467, %v1448
          %v1469 = vrot.slane %v1448, 4
          %v1470 = vsel %vm765, %v1454, %v1469
          %v1472 = vunpack.c.l.s4 1934713408
          %v1473 = vunpack.c.0.s8 %v1472
          %v1474 = vperm.slane %v1468, %v1473
          %v1476 = vunpack.c.l.s4 1934713408
          %v1477 = vunpack.c.0.s8 %v1476
          %v1478 = vperm.slane %v1470, %v1477
          %v1479 = vrot.slane %v1474, 4
          %v1480 = vsel %vm765, %v1479, %v1462
          %v1481 = vrot.slane %v1462, 4
          %v1482 = vsel %vm765, %v1474, %v1481
          %v1483 = vrot.slane %v1478, 4
          %v1484 = vsel %vm765, %v1483, %v1466
          %v1485 = vrot.slane %v1466, 4
          %v1486 = vsel %vm765, %v1478, %v1485
          %v1487 = vsel %vm765, %v983, %v964
          %v1489 = vunpack.c.l.s4 1983009808
          %v1490 = vunpack.c.0.s8 %v1489
          %v1491 = vperm.slane %v1487, %v1490
          %v1492 = vrot.slane %v984, 4
          %v1493 = vsel %vm765, %v1492, %v982
          %v1495 = vunpack.c.l.s4 1983009808
          %v1496 = vunpack.c.0.s8 %v1495
          %v1497 = vperm.slane %v1493, %v1496
          %v1498 = vsel %vm765, %v987, %v976
          %v1500 = vunpack.c.l.s4 1983009808
          %v1501 = vunpack.c.0.s8 %v1500
          %v1502 = vperm.slane %v1498, %v1501
          %v1503 = vrot.slane %v988, 4
          %v1504 = vsel %vm765, %v1503, %v986
          %v1506 = vunpack.c.l.s4 1983009808
          %v1507 = vunpack.c.0.s8 %v1506
          %v1508 = vperm.slane %v1504, %v1507
          %v1509 = vrot.slane %v1497, 4
          %v1510 = vsel %vm765, %v1509, %v1491
          %v1511 = vrot.slane %v1491, 4
          %v1512 = vsel %vm765, %v1497, %v1511
          %v1514 = vunpack.c.l.s4 1934713408
          %v1515 = vunpack.c.0.s8 %v1514
          %v1516 = vperm.slane %v1510, %v1515
          %v1518 = vunpack.c.l.s4 1934713408
          %v1519 = vunpack.c.0.s8 %v1518
          %v1520 = vperm.slane %v1512, %v1519
          %v1521 = vrot.slane %v1508, 4
          %v1522 = vsel %vm765, %v1521, %v1502
          %v1523 = vrot.slane %v1502, 4
          %v1524 = vsel %vm765, %v1508, %v1523
          %v1526 = vunpack.c.l.s4 1934713408
          %v1527 = vunpack.c.0.s8 %v1526
          %v1528 = vperm.slane %v1522, %v1527
          %v1530 = vunpack.c.l.s4 1934713408
          %v1531 = vunpack.c.0.s8 %v1530
          %v1532 = vperm.slane %v1524, %v1531
          %v1533 = vrot.slane %v1528, 4
          %v1534 = vsel %vm765, %v1533, %v1516
          %v1535 = vrot.slane %v1516, 4
          %v1536 = vsel %vm765, %v1528, %v1535
          %v1537 = vrot.slane %v1532, 4
          %v1538 = vsel %vm765, %v1537, %v1520
          %v1539 = vrot.slane %v1520, 4
          %v1540 = vsel %vm765, %v1532, %v1539
          %v1541 = vsel %vm765, %v1039, %v1020
          %v1543 = vunpack.c.l.s4 1983009808
          %v1544 = vunpack.c.0.s8 %v1543
          %v1545 = vperm.slane %v1541, %v1544
          %v1546 = vrot.slane %v1040, 4
          %v1547 = vsel %vm765, %v1546, %v1038
          %v1549 = vunpack.c.l.s4 1983009808
          %v1550 = vunpack.c.0.s8 %v1549
          %v1551 = vperm.slane %v1547, %v1550
          %v1552 = vsel %vm765, %v1043, %v1032
          %v1554 = vunpack.c.l.s4 1983009808
          %v1555 = vunpack.c.0.s8 %v1554
          %v1556 = vperm.slane %v1552, %v1555
          %v1557 = vrot.slane %v1044, 4
          %v1558 = vsel %vm765, %v1557, %v1042
          %v1560 = vunpack.c.l.s4 1983009808
          %v1561 = vunpack.c.0.s8 %v1560
          %v1562 = vperm.slane %v1558, %v1561
          %v1563 = vrot.slane %v1551, 4
          %v1564 = vsel %vm765, %v1563, %v1545
          %v1565 = vrot.slane %v1545, 4
          %v1566 = vsel %vm765, %v1551, %v1565
          %v1568 = vunpack.c.l.s4 1934713408
          %v1569 = vunpack.c.0.s8 %v1568
          %v1570 = vperm.slane %v1564, %v1569
          %v1572 = vunpack.c.l.s4 1934713408
          %v1573 = vunpack.c.0.s8 %v1572
          %v1574 = vperm.slane %v1566, %v1573
          %v1575 = vrot.slane %v1562, 4
          %v1576 = vsel %vm765, %v1575, %v1556
          %v1577 = vrot.slane %v1556, 4
          %v1578 = vsel %vm765, %v1562, %v1577
          %v1580 = vunpack.c.l.s4 1934713408
          %v1581 = vunpack.c.0.s8 %v1580
          %v1582 = vperm.slane %v1576, %v1581
          %v1584 = vunpack.c.l.s4 1934713408
          %v1585 = vunpack.c.0.s8 %v1584
          %v1586 = vperm.slane %v1578, %v1585
          %v1587 = vrot.slane %v1582, 4
          %v1588 = vsel %vm765, %v1587, %v1570
          %v1589 = vrot.slane %v1570, 4
          %v1590 = vsel %vm765, %v1582, %v1589
          %v1591 = vrot.slane %v1586, 4
          %v1592 = vsel %vm765, %v1591, %v1574
          %v1593 = vrot.slane %v1574, 4
          %v1594 = vsel %vm765, %v1586, %v1593
          %v1595 = vsel %vm765, %v1095, %v1076
          %v1597 = vunpack.c.l.s4 1983009808
          %v1598 = vunpack.c.0.s8 %v1597
          %v1599 = vperm.slane %v1595, %v1598
          %v1600 = vrot.slane %v1096, 4
          %v1601 = vsel %vm765, %v1600, %v1094
          %v1603 = vunpack.c.l.s4 1983009808
          %v1604 = vunpack.c.0.s8 %v1603
          %v1605 = vperm.slane %v1601, %v1604
          %v1606 = vsel %vm765, %v1099, %v1088
          %v1608 = vunpack.c.l.s4 1983009808
          %v1609 = vunpack.c.0.s8 %v1608
          %v1610 = vperm.slane %v1606, %v1609
          %v1611 = vrot.slane %v1100, 4
          %v1612 = vsel %vm765, %v1611, %v1098
          %v1614 = vunpack.c.l.s4 1983009808
          %v1615 = vunpack.c.0.s8 %v1614
          %v1616 = vperm.slane %v1612, %v1615
          %v1617 = vrot.slane %v1605, 4
          %v1618 = vsel %vm765, %v1617, %v1599
          %v1619 = vrot.slane %v1599, 4
          %v1620 = vsel %vm765, %v1605, %v1619
          %v1622 = vunpack.c.l.s4 1934713408
          %v1623 = vunpack.c.0.s8 %v1622
          %v1624 = vperm.slane %v1618, %v1623
          %v1626 = vunpack.c.l.s4 1934713408
          %v1627 = vunpack.c.0.s8 %v1626
          %v1628 = vperm.slane %v1620, %v1627
          %v1629 = vrot.slane %v1616, 4
          %v1630 = vsel %vm765, %v1629, %v1610
          %v1631 = vrot.slane %v1610, 4
          %v1632 = vsel %vm765, %v1616, %v1631
          %v1634 = vunpack.c.l.s4 1934713408
          %v1635 = vunpack.c.0.s8 %v1634
          %v1636 = vperm.slane %v1630, %v1635
          %v1638 = vunpack.c.l.s4 1934713408
          %v1639 = vunpack.c.0.s8 %v1638
          %v1640 = vperm.slane %v1632, %v1639
          %v1641 = vrot.slane %v1636, 4
          %v1642 = vsel %vm765, %v1641, %v1624
          %v1643 = vrot.slane %v1624, 4
          %v1644 = vsel %vm765, %v1636, %v1643
          %v1645 = vrot.slane %v1640, 4
          %v1646 = vsel %vm765, %v1645, %v1628
          %v1647 = vrot.slane %v1628, 4
          %v1648 = vsel %vm765, %v1640, %v1647
          %v1649 = vsel %vm765, %v1151, %v1132
          %v1651 = vunpack.c.l.s4 1983009808
          %v1652 = vunpack.c.0.s8 %v1651
          %v1653 = vperm.slane %v1649, %v1652
          %v1654 = vrot.slane %v1152, 4
          %v1655 = vsel %vm765, %v1654, %v1150
          %v1657 = vunpack.c.l.s4 1983009808
          %v1658 = vunpack.c.0.s8 %v1657
          %v1659 = vperm.slane %v1655, %v1658
          %v1660 = vsel %vm765, %v1155, %v1144
          %v1662 = vunpack.c.l.s4 1983009808
          %v1663 = vunpack.c.0.s8 %v1662
          %v1664 = vperm.slane %v1660, %v1663
          %v1665 = vrot.slane %v1156, 4
          %v1666 = vsel %vm765, %v1665, %v1154
          %v1668 = vunpack.c.l.s4 1983009808
          %v1669 = vunpack.c.0.s8 %v1668
          %v1670 = vperm.slane %v1666, %v1669
          %v1671 = vrot.slane %v1659, 4
          %v1672 = vsel %vm765, %v1671, %v1653
          %v1673 = vrot.slane %v1653, 4
          %v1674 = vsel %vm765, %v1659, %v1673
          %v1676 = vunpack.c.l.s4 1934713408
          %v1677 = vunpack.c.0.s8 %v1676
          %v1678 = vperm.slane %v1672, %v1677
          %v1680 = vunpack.c.l.s4 1934713408
          %v1681 = vunpack.c.0.s8 %v1680
          %v1682 = vperm.slane %v1674, %v1681
          %v1683 = vrot.slane %v1670, 4
          %v1684 = vsel %vm765, %v1683, %v1664
          %v1685 = vrot.slane %v1664, 4
          %v1686 = vsel %vm765, %v1670, %v1685
          %v1688 = vunpack.c.l.s4 1934713408
          %v1689 = vunpack.c.0.s8 %v1688
          %v1690 = vperm.slane %v1684, %v1689
          %v1692 = vunpack.c.l.s4 1934713408
          %v1693 = vunpack.c.0.s8 %v1692
          %v1694 = vperm.slane %v1686, %v1693
          %v1695 = vrot.slane %v1690, 4
          %v1696 = vsel %vm765, %v1695, %v1678
          %v1697 = vrot.slane %v1678, 4
          %v1698 = vsel %vm765, %v1690, %v1697
          %v1699 = vrot.slane %v1694, 4
          %v1700 = vsel %vm765, %v1699, %v1682
          %v1701 = vrot.slane %v1682, 4
          %v1702 = vsel %vm765, %v1694, %v1701
          %v1703 = vsel %vm765, %v1207, %v1188
          %v1705 = vunpack.c.l.s4 1983009808
          %v1706 = vunpack.c.0.s8 %v1705
          %v1707 = vperm.slane %v1703, %v1706
          %v1708 = vrot.slane %v1208, 4
          %v1709 = vsel %vm765, %v1708, %v1206
          %v1711 = vunpack.c.l.s4 1983009808
          %v1712 = vunpack.c.0.s8 %v1711
          %v1713 = vperm.slane %v1709, %v1712
          %v1714 = vsel %vm765, %v1211, %v1200
          %v1716 = vunpack.c.l.s4 1983009808
          %v1717 = vunpack.c.0.s8 %v1716
          %v1718 = vperm.slane %v1714, %v1717
          %v1719 = vrot.slane %v1212, 4
          %v1720 = vsel %vm765, %v1719, %v1210
          %v1722 = vunpack.c.l.s4 1983009808
          %v1723 = vunpack.c.0.s8 %v1722
          %v1724 = vperm.slane %v1720, %v1723
          %v1725 = vrot.slane %v1713, 4
          %v1726 = vsel %vm765, %v1725, %v1707
          %v1727 = vrot.slane %v1707, 4
          %v1728 = vsel %vm765, %v1713, %v1727
          %v1730 = vunpack.c.l.s4 1934713408
          %v1731 = vunpack.c.0.s8 %v1730
          %v1732 = vperm.slane %v1726, %v1731
          %v1734 = vunpack.c.l.s4 1934713408
          %v1735 = vunpack.c.0.s8 %v1734
          %v1736 = vperm.slane %v1728, %v1735
          %v1737 = vrot.slane %v1724, 4
          %v1738 = vsel %vm765, %v1737, %v1718
          %v1739 = vrot.slane %v1718, 4
          %v1740 = vsel %vm765, %v1724, %v1739
          %v1742 = vunpack.c.l.s4 1934713408
          %v1743 = vunpack.c.0.s8 %v1742
          %v1744 = vperm.slane %v1738, %v1743
          %v1746 = vunpack.c.l.s4 1934713408
          %v1747 = vunpack.c.0.s8 %v1746
          %v1748 = vperm.slane %v1740, %v1747
          %v1749 = vrot.slane %v1744, 4
          %v1750 = vsel %vm765, %v1749, %v1732
          %v1751 = vrot.slane %v1732, 4
          %v1752 = vsel %vm765, %v1744, %v1751
          %v1753 = vrot.slane %v1748, 4
          %v1754 = vsel %vm765, %v1753, %v1736
          %v1755 = vrot.slane %v1736, 4
          %v1756 = vsel %vm765, %v1748, %v1755
          %v1757 = vsel %vm765, %v1263, %v1244
          %v1759 = vunpack.c.l.s4 1983009808
          %v1760 = vunpack.c.0.s8 %v1759
          %v1761 = vperm.slane %v1757, %v1760
          %v1762 = vrot.slane %v1264, 4
          %v1763 = vsel %vm765, %v1762, %v1262
          %v1765 = vunpack.c.l.s4 1983009808
          %v1766 = vunpack.c.0.s8 %v1765
          %v1767 = vperm.slane %v1763, %v1766
          %v1768 = vsel %vm765, %v1267, %v1256
          %v1770 = vunpack.c.l.s4 1983009808
          %v1771 = vunpack.c.0.s8 %v1770
          %v1772 = vperm.slane %v1768, %v1771
          %v1773 = vrot.slane %v1268, 4
          %v1774 = vsel %vm765, %v1773, %v1266
          %v1776 = vunpack.c.l.s4 1983009808
          %v1777 = vunpack.c.0.s8 %v1776
          %v1778 = vperm.slane %v1774, %v1777
          %v1779 = vrot.slane %v1767, 4
          %v1780 = vsel %vm765, %v1779, %v1761
          %v1781 = vrot.slane %v1761, 4
          %v1782 = vsel %vm765, %v1767, %v1781
          %v1784 = vunpack.c.l.s4 1934713408
          %v1785 = vunpack.c.0.s8 %v1784
          %v1786 = vperm.slane %v1780, %v1785
          %v1788 = vunpack.c.l.s4 1934713408
          %v1789 = vunpack.c.0.s8 %v1788
          %v1790 = vperm.slane %v1782, %v1789
          %v1791 = vrot.slane %v1778, 4
          %v1792 = vsel %vm765, %v1791, %v1772
          %v1793 = vrot.slane %v1772, 4
          %v1794 = vsel %vm765, %v1778, %v1793
          %v1796 = vunpack.c.l.s4 1934713408
          %v1797 = vunpack.c.0.s8 %v1796
          %v1798 = vperm.slane %v1792, %v1797
          %v1800 = vunpack.c.l.s4 1934713408
          %v1801 = vunpack.c.0.s8 %v1800
          %v1802 = vperm.slane %v1794, %v1801
          %v1803 = vrot.slane %v1798, 4
          %v1804 = vsel %vm765, %v1803, %v1786
          %v1805 = vrot.slane %v1786, 4
          %v1806 = vsel %vm765, %v1798, %v1805
          %v1807 = vrot.slane %v1802, 4
          %v1808 = vsel %vm765, %v1807, %v1790
          %v1809 = vrot.slane %v1790, 4
          %v1810 = vsel %vm765, %v1802, %v1809
          %v1811 = vsel %vm765, %v1319, %v1300
          %v1813 = vunpack.c.l.s4 1983009808
          %v1814 = vunpack.c.0.s8 %v1813
          %v1815 = vperm.slane %v1811, %v1814
          %v1816 = vrot.slane %v1320, 4
          %v1817 = vsel %vm765, %v1816, %v1318
          %v1819 = vunpack.c.l.s4 1983009808
          %v1820 = vunpack.c.0.s8 %v1819
          %v1821 = vperm.slane %v1817, %v1820
          %v1822 = vsel %vm765, %v1323, %v1312
          %v1824 = vunpack.c.l.s4 1983009808
          %v1825 = vunpack.c.0.s8 %v1824
          %v1826 = vperm.slane %v1822, %v1825
          %v1827 = vrot.slane %v1324, 4
          %v1828 = vsel %vm765, %v1827, %v1322
          %v1830 = vunpack.c.l.s4 1983009808
          %v1831 = vunpack.c.0.s8 %v1830
          %v1832 = vperm.slane %v1828, %v1831
          %v1833 = vrot.slane %v1821, 4
          %v1834 = vsel %vm765, %v1833, %v1815
          %v1835 = vrot.slane %v1815, 4
          %v1836 = vsel %vm765, %v1821, %v1835
          %v1838 = vunpack.c.l.s4 1934713408
          %v1839 = vunpack.c.0.s8 %v1838
          %v1840 = vperm.slane %v1834, %v1839
          %v1842 = vunpack.c.l.s4 1934713408
          %v1843 = vunpack.c.0.s8 %v1842
          %v1844 = vperm.slane %v1836, %v1843
          %v1845 = vrot.slane %v1832, 4
          %v1846 = vsel %vm765, %v1845, %v1826
          %v1847 = vrot.slane %v1826, 4
          %v1848 = vsel %vm765, %v1832, %v1847
          %v1850 = vunpack.c.l.s4 1934713408
          %v1851 = vunpack.c.0.s8 %v1850
          %v1852 = vperm.slane %v1846, %v1851
          %v1854 = vunpack.c.l.s4 1934713408
          %v1855 = vunpack.c.0.s8 %v1854
          %v1856 = vperm.slane %v1848, %v1855
          %v1857 = vrot.slane %v1852, 4
          %v1858 = vsel %vm765, %v1857, %v1840
          %v1859 = vrot.slane %v1840, 4
          %v1860 = vsel %vm765, %v1852, %v1859
          %v1861 = vrot.slane %v1856, 4
          %v1862 = vsel %vm765, %v1861, %v1844
          %v1863 = vrot.slane %v1844, 4
          %v1864 = vsel %vm765, %v1856, %v1863
          %v1865 = vrot.slane %v1376, 4
          %v1866 = vsel %vm765, %v1865, %v1372
          %v1867 = vrot.slane %v1372, 4
          %v1868 = vsel %vm765, %v1376, %v1867
          %v1870 = vunpack.c.l.s4 1983009808
          %v1871 = vunpack.c.0.s8 %v1870
          %v1872 = vperm.slane %v1866, %v1871
          %v1874 = vunpack.c.l.s4 1983009808
          %v1875 = vunpack.c.0.s8 %v1874
          %v1876 = vperm.slane %v1868, %v1875
          %v1877 = vrot.slane %v1378, 4
          %v1878 = vsel %vm765, %v1877, %v1374
          %v1879 = vrot.slane %v1374, 4
          %v1880 = vsel %vm765, %v1378, %v1879
          %v1882 = vunpack.c.l.s4 1983009808
          %v1883 = vunpack.c.0.s8 %v1882
          %v1884 = vperm.slane %v1878, %v1883
          %v1886 = vunpack.c.l.s4 1983009808
          %v1887 = vunpack.c.0.s8 %v1886
          %v1888 = vperm.slane %v1880, %v1887
          %v1889 = vrot.slane %v1884, 4
          %v1890 = vsel %vm765, %v1889, %v1872
          %v1891 = vrot.slane %v1872, 4
          %v1892 = vsel %vm765, %v1884, %v1891
          %v1894 = vunpack.c.l.s4 1934713408
          %v1895 = vunpack.c.0.s8 %v1894
          %v1896 = vperm.slane %v1890, %v1895
          %v1898 = vunpack.c.l.s4 1934713408
          %v1899 = vunpack.c.0.s8 %v1898
          %v1900 = vperm.slane %v1892, %v1899
          %v1901 = vrot.slane %v1888, 4
          %v1902 = vsel %vm765, %v1901, %v1876
          %v1903 = vrot.slane %v1876, 4
          %v1904 = vsel %vm765, %v1888, %v1903
          %v1906 = vunpack.c.l.s4 1934713408
          %v1907 = vunpack.c.0.s8 %v1906
          %v1908 = vperm.slane %v1902, %v1907
          %v1910 = vunpack.c.l.s4 1934713408
          %v1911 = vunpack.c.0.s8 %v1910
          %v1912 = vperm.slane %v1904, %v1911
          %v1913 = vrot.slane %v1896, 4
          %v1914 = vsel %vm765, 0.0, %v1913
          %v1915 = vrot.slane %v1900, 4
          %v1916 = vsel %vm765, 0.0, %v1915
          %v1917 = vrot.slane %v1908, 4
          %v1918 = vsel %vm765, 0.0, %v1917
          %v1919 = vrot.slane %v1912, 4
          %v1920 = vsel %vm765, 0.0, %v1919
          %v1921 = vrot.slane %v1430, 4
          %v1922 = vsel %vm765, %v1921, %v1426
          %v1923 = vrot.slane %v1426, 4
          %v1924 = vsel %vm765, %v1430, %v1923
          %v1926 = vunpack.c.l.s4 1983009808
          %v1927 = vunpack.c.0.s8 %v1926
          %v1928 = vperm.slane %v1922, %v1927
          %v1930 = vunpack.c.l.s4 1983009808
          %v1931 = vunpack.c.0.s8 %v1930
          %v1932 = vperm.slane %v1924, %v1931
          %v1933 = vrot.slane %v1432, 4
          %v1934 = vsel %vm765, %v1933, %v1428
          %v1935 = vrot.slane %v1428, 4
          %v1936 = vsel %vm765, %v1432, %v1935
          %v1938 = vunpack.c.l.s4 1983009808
          %v1939 = vunpack.c.0.s8 %v1938
          %v1940 = vperm.slane %v1934, %v1939
          %v1942 = vunpack.c.l.s4 1983009808
          %v1943 = vunpack.c.0.s8 %v1942
          %v1944 = vperm.slane %v1936, %v1943
          %v1945 = vrot.slane %v1940, 4
          %v1946 = vsel %vm765, %v1945, %v1928
          %v1947 = vrot.slane %v1928, 4
          %v1948 = vsel %vm765, %v1940, %v1947
          %v1950 = vunpack.c.l.s4 1934713408
          %v1951 = vunpack.c.0.s8 %v1950
          %v1952 = vperm.slane %v1946, %v1951
          %v1954 = vunpack.c.l.s4 1934713408
          %v1955 = vunpack.c.0.s8 %v1954
          %v1956 = vperm.slane %v1948, %v1955
          %v1957 = vrot.slane %v1944, 4
          %v1958 = vsel %vm765, %v1957, %v1932
          %v1959 = vrot.slane %v1932, 4
          %v1960 = vsel %vm765, %v1944, %v1959
          %v1962 = vunpack.c.l.s4 1934713408
          %v1963 = vunpack.c.0.s8 %v1962
          %v1964 = vperm.slane %v1958, %v1963
          %v1966 = vunpack.c.l.s4 1934713408
          %v1967 = vunpack.c.0.s8 %v1966
          %v1968 = vperm.slane %v1960, %v1967
          %v1969 = vrot.slane %v1952, 4
          %v1970 = vsel %vm765, 0.0, %v1969
          %v1971 = vrot.slane %v1956, 4
          %v1972 = vsel %vm765, 0.0, %v1971
          %v1973 = vrot.slane %v1964, 4
          %v1974 = vsel %vm765, 0.0, %v1973
          %v1975 = vrot.slane %v1968, 4
          %v1976 = vsel %vm765, 0.0, %v1975
          %v1977 = vrot.slane %v1484, 4
          %v1978 = vsel %vm765, %v1977, %v1480
          %v1979 = vrot.slane %v1480, 4
          %v1980 = vsel %vm765, %v1484, %v1979
          %v1982 = vunpack.c.l.s4 1983009808
          %v1983 = vunpack.c.0.s8 %v1982
          %v1984 = vperm.slane %v1978, %v1983
          %v1986 = vunpack.c.l.s4 1983009808
          %v1987 = vunpack.c.0.s8 %v1986
          %v1988 = vperm.slane %v1980, %v1987
          %v1989 = vrot.slane %v1486, 4
          %v1990 = vsel %vm765, %v1989, %v1482
          %v1991 = vrot.slane %v1482, 4
          %v1992 = vsel %vm765, %v1486, %v1991
          %v1994 = vunpack.c.l.s4 1983009808
          %v1995 = vunpack.c.0.s8 %v1994
          %v1996 = vperm.slane %v1990, %v1995
          %v1998 = vunpack.c.l.s4 1983009808
          %v1999 = vunpack.c.0.s8 %v1998
          %v2000 = vperm.slane %v1992, %v1999
          %v2001 = vrot.slane %v1996, 4
          %v2002 = vsel %vm765, %v2001, %v1984
          %v2003 = vrot.slane %v1984, 4
          %v2004 = vsel %vm765, %v1996, %v2003
          %v2006 = vunpack.c.l.s4 1934713408
          %v2007 = vunpack.c.0.s8 %v2006
          %v2008 = vperm.slane %v2002, %v2007
          %v2010 = vunpack.c.l.s4 1934713408
          %v2011 = vunpack.c.0.s8 %v2010
          %v2012 = vperm.slane %v2004, %v2011
          %v2013 = vrot.slane %v2000, 4
          %v2014 = vsel %vm765, %v2013, %v1988
          %v2015 = vrot.slane %v1988, 4
          %v2016 = vsel %vm765, %v2000, %v2015
          %v2018 = vunpack.c.l.s4 1934713408
          %v2019 = vunpack.c.0.s8 %v2018
          %v2020 = vperm.slane %v2014, %v2019
          %v2022 = vunpack.c.l.s4 1934713408
          %v2023 = vunpack.c.0.s8 %v2022
          %v2024 = vperm.slane %v2016, %v2023
          %v2025 = vrot.slane %v2008, 4
          %v2026 = vsel %vm765, 0.0, %v2025
          %v2027 = vrot.slane %v2012, 4
          %v2028 = vsel %vm765, 0.0, %v2027
          %v2029 = vrot.slane %v2020, 4
          %v2030 = vsel %vm765, 0.0, %v2029
          %v2031 = vrot.slane %v2024, 4
          %v2032 = vsel %vm765, 0.0, %v2031
          %v2033 = vrot.slane %v1538, 4
          %v2034 = vsel %vm765, %v2033, %v1534
          %v2035 = vrot.slane %v1534, 4
          %v2036 = vsel %vm765, %v1538, %v2035
          %v2038 = vunpack.c.l.s4 1983009808
          %v2039 = vunpack.c.0.s8 %v2038
          %v2040 = vperm.slane %v2034, %v2039
          %v2042 = vunpack.c.l.s4 1983009808
          %v2043 = vunpack.c.0.s8 %v2042
          %v2044 = vperm.slane %v2036, %v2043
          %v2045 = vrot.slane %v1540, 4
          %v2046 = vsel %vm765, %v2045, %v1536
          %v2047 = vrot.slane %v1536, 4
          %v2048 = vsel %vm765, %v1540, %v2047
          %v2050 = vunpack.c.l.s4 1983009808
          %v2051 = vunpack.c.0.s8 %v2050
          %v2052 = vperm.slane %v2046, %v2051
          %v2054 = vunpack.c.l.s4 1983009808
          %v2055 = vunpack.c.0.s8 %v2054
          %v2056 = vperm.slane %v2048, %v2055
          %v2057 = vrot.slane %v2052, 4
          %v2058 = vsel %vm765, %v2057, %v2040
          %v2059 = vrot.slane %v2040, 4
          %v2060 = vsel %vm765, %v2052, %v2059
          %v2062 = vunpack.c.l.s4 1934713408
          %v2063 = vunpack.c.0.s8 %v2062
          %v2064 = vperm.slane %v2058, %v2063
          %v2066 = vunpack.c.l.s4 1934713408
          %v2067 = vunpack.c.0.s8 %v2066
          %v2068 = vperm.slane %v2060, %v2067
          %v2069 = vrot.slane %v2056, 4
          %v2070 = vsel %vm765, %v2069, %v2044
          %v2071 = vrot.slane %v2044, 4
          %v2072 = vsel %vm765, %v2056, %v2071
          %v2074 = vunpack.c.l.s4 1934713408
          %v2075 = vunpack.c.0.s8 %v2074
          %v2076 = vperm.slane %v2070, %v2075
          %v2078 = vunpack.c.l.s4 1934713408
          %v2079 = vunpack.c.0.s8 %v2078
          %v2080 = vperm.slane %v2072, %v2079
          %v2081 = vrot.slane %v2064, 4
          %v2082 = vsel %vm765, 0.0, %v2081
          %v2083 = vrot.slane %v2068, 4
          %v2084 = vsel %vm765, 0.0, %v2083
          %v2085 = vrot.slane %v2076, 4
          %v2086 = vsel %vm765, 0.0, %v2085
          %v2087 = vrot.slane %v2080, 4
          %v2088 = vsel %vm765, 0.0, %v2087
          %v2089 = vrot.slane %v1592, 4
          %v2090 = vsel %vm765, %v2089, %v1588
          %v2091 = vrot.slane %v1588, 4
          %v2092 = vsel %vm765, %v1592, %v2091
          %v2094 = vunpack.c.l.s4 1983009808
          %v2095 = vunpack.c.0.s8 %v2094
          %v2096 = vperm.slane %v2090, %v2095
          %v2098 = vunpack.c.l.s4 1983009808
          %v2099 = vunpack.c.0.s8 %v2098
          %v2100 = vperm.slane %v2092, %v2099
          %v2101 = vrot.slane %v1594, 4
          %v2102 = vsel %vm765, %v2101, %v1590
          %v2103 = vrot.slane %v1590, 4
          %v2104 = vsel %vm765, %v1594, %v2103
          %v2106 = vunpack.c.l.s4 1983009808
          %v2107 = vunpack.c.0.s8 %v2106
          %v2108 = vperm.slane %v2102, %v2107
          %v2110 = vunpack.c.l.s4 1983009808
          %v2111 = vunpack.c.0.s8 %v2110
          %v2112 = vperm.slane %v2104, %v2111
          %v2113 = vrot.slane %v2108, 4
          %v2114 = vsel %vm765, %v2113, %v2096
          %v2115 = vrot.slane %v2096, 4
          %v2116 = vsel %vm765, %v2108, %v2115
          %v2118 = vunpack.c.l.s4 1934713408
          %v2119 = vunpack.c.0.s8 %v2118
          %v2120 = vperm.slane %v2114, %v2119
          %v2122 = vunpack.c.l.s4 1934713408
          %v2123 = vunpack.c.0.s8 %v2122
          %v2124 = vperm.slane %v2116, %v2123
          %v2125 = vrot.slane %v2112, 4
          %v2126 = vsel %vm765, %v2125, %v2100
          %v2127 = vrot.slane %v2100, 4
          %v2128 = vsel %vm765, %v2112, %v2127
          %v2130 = vunpack.c.l.s4 1934713408
          %v2131 = vunpack.c.0.s8 %v2130
          %v2132 = vperm.slane %v2126, %v2131
          %v2134 = vunpack.c.l.s4 1934713408
          %v2135 = vunpack.c.0.s8 %v2134
          %v2136 = vperm.slane %v2128, %v2135
          %v2137 = vrot.slane %v2120, 4
          %v2138 = vsel %vm765, 0.0, %v2137
          %v2139 = vrot.slane %v2124, 4
          %v2140 = vsel %vm765, 0.0, %v2139
          %v2141 = vrot.slane %v2132, 4
          %v2142 = vsel %vm765, 0.0, %v2141
          %v2143 = vrot.slane %v2136, 4
          %v2144 = vsel %vm765, 0.0, %v2143
          %v2145 = vrot.slane %v1646, 4
          %v2146 = vsel %vm765, %v2145, %v1642
          %v2147 = vrot.slane %v1642, 4
          %v2148 = vsel %vm765, %v1646, %v2147
          %v2150 = vunpack.c.l.s4 1983009808
          %v2151 = vunpack.c.0.s8 %v2150
          %v2152 = vperm.slane %v2146, %v2151
          %v2154 = vunpack.c.l.s4 1983009808
          %v2155 = vunpack.c.0.s8 %v2154
          %v2156 = vperm.slane %v2148, %v2155
          %v2157 = vrot.slane %v1648, 4
          %v2158 = vsel %vm765, %v2157, %v1644
          %v2159 = vrot.slane %v1644, 4
          %v2160 = vsel %vm765, %v1648, %v2159
          %v2162 = vunpack.c.l.s4 1983009808
          %v2163 = vunpack.c.0.s8 %v2162
          %v2164 = vperm.slane %v2158, %v2163
          %v2166 = vunpack.c.l.s4 1983009808
          %v2167 = vunpack.c.0.s8 %v2166
          %v2168 = vperm.slane %v2160, %v2167
          %v2169 = vrot.slane %v2164, 4
          %v2170 = vsel %vm765, %v2169, %v2152
          %v2171 = vrot.slane %v2152, 4
          %v2172 = vsel %vm765, %v2164, %v2171
          %v2174 = vunpack.c.l.s4 1934713408
          %v2175 = vunpack.c.0.s8 %v2174
          %v2176 = vperm.slane %v2170, %v2175
          %v2178 = vunpack.c.l.s4 1934713408
          %v2179 = vunpack.c.0.s8 %v2178
          %v2180 = vperm.slane %v2172, %v2179
          %v2181 = vrot.slane %v2168, 4
          %v2182 = vsel %vm765, %v2181, %v2156
          %v2183 = vrot.slane %v2156, 4
          %v2184 = vsel %vm765, %v2168, %v2183
          %v2186 = vunpack.c.l.s4 1934713408
          %v2187 = vunpack.c.0.s8 %v2186
          %v2188 = vperm.slane %v2182, %v2187
          %v2190 = vunpack.c.l.s4 1934713408
          %v2191 = vunpack.c.0.s8 %v2190
          %v2192 = vperm.slane %v2184, %v2191
          %v2193 = vrot.slane %v2176, 4
          %v2194 = vsel %vm765, 0.0, %v2193
          %v2195 = vrot.slane %v2180, 4
          %v2196 = vsel %vm765, 0.0, %v2195
          %v2197 = vrot.slane %v2188, 4
          %v2198 = vsel %vm765, 0.0, %v2197
          %v2199 = vrot.slane %v2192, 4
          %v2200 = vsel %vm765, 0.0, %v2199
          %v2201 = vrot.slane %v1700, 4
          %v2202 = vsel %vm765, %v2201, %v1696
          %v2203 = vrot.slane %v1696, 4
          %v2204 = vsel %vm765, %v1700, %v2203
          %v2206 = vunpack.c.l.s4 1983009808
          %v2207 = vunpack.c.0.s8 %v2206
          %v2208 = vperm.slane %v2202, %v2207
          %v2210 = vunpack.c.l.s4 1983009808
          %v2211 = vunpack.c.0.s8 %v2210
          %v2212 = vperm.slane %v2204, %v2211
          %v2213 = vrot.slane %v1702, 4
          %v2214 = vsel %vm765, %v2213, %v1698
          %v2215 = vrot.slane %v1698, 4
          %v2216 = vsel %vm765, %v1702, %v2215
          %v2218 = vunpack.c.l.s4 1983009808
          %v2219 = vunpack.c.0.s8 %v2218
          %v2220 = vperm.slane %v2214, %v2219
          %v2222 = vunpack.c.l.s4 1983009808
          %v2223 = vunpack.c.0.s8 %v2222
          %v2224 = vperm.slane %v2216, %v2223
          %v2225 = vrot.slane %v2220, 4
          %v2226 = vsel %vm765, %v2225, %v2208
          %v2227 = vrot.slane %v2208, 4
          %v2228 = vsel %vm765, %v2220, %v2227
          %v2230 = vunpack.c.l.s4 1934713408
          %v2231 = vunpack.c.0.s8 %v2230
          %v2232 = vperm.slane %v2226, %v2231
          %v2234 = vunpack.c.l.s4 1934713408
          %v2235 = vunpack.c.0.s8 %v2234
          %v2236 = vperm.slane %v2228, %v2235
          %v2237 = vrot.slane %v2224, 4
          %v2238 = vsel %vm765, %v2237, %v2212
          %v2239 = vrot.slane %v2212, 4
          %v2240 = vsel %vm765, %v2224, %v2239
          %v2242 = vunpack.c.l.s4 1934713408
          %v2243 = vunpack.c.0.s8 %v2242
          %v2244 = vperm.slane %v2238, %v2243
          %v2246 = vunpack.c.l.s4 1934713408
          %v2247 = vunpack.c.0.s8 %v2246
          %v2248 = vperm.slane %v2240, %v2247
          %v2249 = vrot.slane %v2232, 4
          %v2250 = vsel %vm765, 0.0, %v2249
          %v2251 = vrot.slane %v2236, 4
          %v2252 = vsel %vm765, 0.0, %v2251
          %v2253 = vrot.slane %v2244, 4
          %v2254 = vsel %vm765, 0.0, %v2253
          %v2255 = vrot.slane %v2248, 4
          %v2256 = vsel %vm765, 0.0, %v2255
          %v2257 = vrot.slane %v1754, 4
          %v2258 = vsel %vm765, %v2257, %v1750
          %v2259 = vrot.slane %v1750, 4
          %v2260 = vsel %vm765, %v1754, %v2259
          %v2262 = vunpack.c.l.s4 1983009808
          %v2263 = vunpack.c.0.s8 %v2262
          %v2264 = vperm.slane %v2258, %v2263
          %v2266 = vunpack.c.l.s4 1983009808
          %v2267 = vunpack.c.0.s8 %v2266
          %v2268 = vperm.slane %v2260, %v2267
          %v2269 = vrot.slane %v1756, 4
          %v2270 = vsel %vm765, %v2269, %v1752
          %v2271 = vrot.slane %v1752, 4
          %v2272 = vsel %vm765, %v1756, %v2271
          %v2274 = vunpack.c.l.s4 1983009808
          %v2275 = vunpack.c.0.s8 %v2274
          %v2276 = vperm.slane %v2270, %v2275
          %v2278 = vunpack.c.l.s4 1983009808
          %v2279 = vunpack.c.0.s8 %v2278
          %v2280 = vperm.slane %v2272, %v2279
          %v2281 = vrot.slane %v2276, 4
          %v2282 = vsel %vm765, %v2281, %v2264
          %v2283 = vrot.slane %v2264, 4
          %v2284 = vsel %vm765, %v2276, %v2283
          %v2286 = vunpack.c.l.s4 1934713408
          %v2287 = vunpack.c.0.s8 %v2286
          %v2288 = vperm.slane %v2282, %v2287
          %v2290 = vunpack.c.l.s4 1934713408
          %v2291 = vunpack.c.0.s8 %v2290
          %v2292 = vperm.slane %v2284, %v2291
          %v2293 = vrot.slane %v2280, 4
          %v2294 = vsel %vm765, %v2293, %v2268
          %v2295 = vrot.slane %v2268, 4
          %v2296 = vsel %vm765, %v2280, %v2295
          %v2298 = vunpack.c.l.s4 1934713408
          %v2299 = vunpack.c.0.s8 %v2298
          %v2300 = vperm.slane %v2294, %v2299
          %v2302 = vunpack.c.l.s4 1934713408
          %v2303 = vunpack.c.0.s8 %v2302
          %v2304 = vperm.slane %v2296, %v2303
          %v2305 = vrot.slane %v2288, 4
          %v2306 = vsel %vm765, 0.0, %v2305
          %v2307 = vrot.slane %v2292, 4
          %v2308 = vsel %vm765, 0.0, %v2307
          %v2309 = vrot.slane %v2300, 4
          %v2310 = vsel %vm765, 0.0, %v2309
          %v2311 = vrot.slane %v2304, 4
          %v2312 = vsel %vm765, 0.0, %v2311
          %v2313 = vrot.slane %v1808, 4
          %v2314 = vsel %vm765, %v2313, %v1804
          %v2315 = vrot.slane %v1804, 4
          %v2316 = vsel %vm765, %v1808, %v2315
          %v2318 = vunpack.c.l.s4 1983009808
          %v2319 = vunpack.c.0.s8 %v2318
          %v2320 = vperm.slane %v2314, %v2319
          %v2322 = vunpack.c.l.s4 1983009808
          %v2323 = vunpack.c.0.s8 %v2322
          %v2324 = vperm.slane %v2316, %v2323
          %v2325 = vrot.slane %v1810, 4
          %v2326 = vsel %vm765, %v2325, %v1806
          %v2327 = vrot.slane %v1806, 4
          %v2328 = vsel %vm765, %v1810, %v2327
          %v2330 = vunpack.c.l.s4 1983009808
          %v2331 = vunpack.c.0.s8 %v2330
          %v2332 = vperm.slane %v2326, %v2331
          %v2334 = vunpack.c.l.s4 1983009808
          %v2335 = vunpack.c.0.s8 %v2334
          %v2336 = vperm.slane %v2328, %v2335
          %v2337 = vrot.slane %v2332, 4
          %v2338 = vsel %vm765, %v2337, %v2320
          %v2339 = vrot.slane %v2320, 4
          %v2340 = vsel %vm765, %v2332, %v2339
          %v2342 = vunpack.c.l.s4 1934713408
          %v2343 = vunpack.c.0.s8 %v2342
          %v2344 = vperm.slane %v2338, %v2343
          %v2346 = vunpack.c.l.s4 1934713408
          %v2347 = vunpack.c.0.s8 %v2346
          %v2348 = vperm.slane %v2340, %v2347
          %v2349 = vrot.slane %v2336, 4
          %v2350 = vsel %vm765, %v2349, %v2324
          %v2351 = vrot.slane %v2324, 4
          %v2352 = vsel %vm765, %v2336, %v2351
          %v2354 = vunpack.c.l.s4 1934713408
          %v2355 = vunpack.c.0.s8 %v2354
          %v2356 = vperm.slane %v2350, %v2355
          %v2358 = vunpack.c.l.s4 1934713408
          %v2359 = vunpack.c.0.s8 %v2358
          %v2360 = vperm.slane %v2352, %v2359
          %v2361 = vrot.slane %v2344, 4
          %v2362 = vsel %vm765, 0.0, %v2361
          %v2363 = vrot.slane %v2348, 4
          %v2364 = vsel %vm765, 0.0, %v2363
          %v2365 = vrot.slane %v2356, 4
          %v2366 = vsel %vm765, 0.0, %v2365
          %v2367 = vrot.slane %v2360, 4
          %v2368 = vsel %vm765, 0.0, %v2367
          %v2369 = vrot.slane %v1862, 4
          %v2370 = vsel %vm765, %v2369, %v1858
          %v2371 = vrot.slane %v1858, 4
          %v2372 = vsel %vm765, %v1862, %v2371
          %v2374 = vunpack.c.l.s4 1983009808
          %v2375 = vunpack.c.0.s8 %v2374
          %v2376 = vperm.slane %v2370, %v2375
          %v2378 = vunpack.c.l.s4 1983009808
          %v2379 = vunpack.c.0.s8 %v2378
          %v2380 = vperm.slane %v2372, %v2379
          %v2381 = vrot.slane %v1864, 4
          %v2382 = vsel %vm765, %v2381, %v1860
          %v2383 = vrot.slane %v1860, 4
          %v2384 = vsel %vm765, %v1864, %v2383
          %v2386 = vunpack.c.l.s4 1983009808
          %v2387 = vunpack.c.0.s8 %v2386
          %v2388 = vperm.slane %v2382, %v2387
          %v2390 = vunpack.c.l.s4 1983009808
          %v2391 = vunpack.c.0.s8 %v2390
          %v2392 = vperm.slane %v2384, %v2391
          %v2393 = vrot.slane %v2388, 4
          %v2394 = vsel %vm765, %v2393, %v2376
          %v2395 = vrot.slane %v2376, 4
          %v2396 = vsel %vm765, %v2388, %v2395
          %v2398 = vunpack.c.l.s4 1934713408
          %v2399 = vunpack.c.0.s8 %v2398
          %v2400 = vperm.slane %v2394, %v2399
          %v2402 = vunpack.c.l.s4 1934713408
          %v2403 = vunpack.c.0.s8 %v2402
          %v2404 = vperm.slane %v2396, %v2403
          %v2405 = vrot.slane %v2392, 4
          %v2406 = vsel %vm765, %v2405, %v2380
          %v2407 = vrot.slane %v2380, 4
          %v2408 = vsel %vm765, %v2392, %v2407
          %v2410 = vunpack.c.l.s4 1934713408
          %v2411 = vunpack.c.0.s8 %v2410
          %v2412 = vperm.slane %v2406, %v2411
          %v2414 = vunpack.c.l.s4 1934713408
          %v2415 = vunpack.c.0.s8 %v2414
          %v2416 = vperm.slane %v2408, %v2415
          %v2417 = vrot.slane %v2400, 4
          %v2418 = vsel %vm765, 0.0, %v2417
          %v2419 = vrot.slane %v2404, 4
          %v2420 = vsel %vm765, 0.0, %v2419
          %v2421 = vrot.slane %v2412, 4
          %v2422 = vsel %vm765, 0.0, %v2421
          %v2423 = vrot.slane %v2416, 4
          %v2424 = vsel %vm765, 0.0, %v2423
          %2426 = vrot.lane.b32.xlu0 %v1914, 16
          %v2427 = vpop.permute.xlu0 %2426
          %2430 = vrot.lane.b32.xlu0 %v1900, 32
          %v2431 = vpop.permute.xlu0 %2430
          %2434 = vrot.lane.b32.xlu0 %v1916, 48
          %v2435 = vpop.permute.xlu0 %2434
          %2438 = vrot.lane.b32.xlu0 %v1908, 64
          %v2439 = vpop.permute.xlu0 %2438
          %2442 = vrot.lane.b32.xlu0 %v1918, 80
          %v2443 = vpop.permute.xlu0 %2442
          %2446 = vrot.lane.b32.xlu0 %v1912, 96
          %v2447 = vpop.permute.xlu0 %2446
          %2450 = vrot.lane.b32.xlu0 %v1920, 112
          %v2451 = vpop.permute.xlu0 %2450
          %2454 = vrot.lane.b32.xlu0 %v1970, 16
          %v2455 = vpop.permute.xlu0 %2454
          %2458 = vrot.lane.b32.xlu0 %v1956, 32
          %v2459 = vpop.permute.xlu0 %2458
          %2462 = vrot.lane.b32.xlu0 %v1972, 48
          %v2463 = vpop.permute.xlu0 %2462
          %2466 = vrot.lane.b32.xlu0 %v1964, 64
          %v2467 = vpop.permute.xlu0 %2466
          %2470 = vrot.lane.b32.xlu0 %v1974, 80
          %v2471 = vpop.permute.xlu0 %2470
          %2474 = vrot.lane.b32.xlu0 %v1968, 96
          %v2475 = vpop.permute.xlu0 %2474
          %2478 = vrot.lane.b32.xlu0 %v1976, 112
          %v2479 = vpop.permute.xlu0 %2478
          %2482 = vrot.lane.b32.xlu0 %v2026, 16
          %v2483 = vpop.permute.xlu0 %2482
          %2486 = vrot.lane.b32.xlu0 %v2012, 32
          %v2487 = vpop.permute.xlu0 %2486
          %2490 = vrot.lane.b32.xlu0 %v2028, 48
          %v2491 = vpop.permute.xlu0 %2490
          %2494 = vrot.lane.b32.xlu0 %v2020, 64
          %v2495 = vpop.permute.xlu0 %2494
          %2498 = vrot.lane.b32.xlu0 %v2030, 80
          %v2499 = vpop.permute.xlu0 %2498
          %2502 = vrot.lane.b32.xlu0 %v2024, 96
          %v2503 = vpop.permute.xlu0 %2502
          %2506 = vrot.lane.b32.xlu0 %v2032, 112
          %v2507 = vpop.permute.xlu0 %2506
          %2510 = vrot.lane.b32.xlu0 %v2082, 16
          %v2511 = vpop.permute.xlu0 %2510
          %2514 = vrot.lane.b32.xlu0 %v2068, 32
          %v2515 = vpop.permute.xlu0 %2514
          %2518 = vrot.lane.b32.xlu0 %v2084, 48
          %v2519 = vpop.permute.xlu0 %2518
          %2522 = vrot.lane.b32.xlu0 %v2076, 64
          %v2523 = vpop.permute.xlu0 %2522
          %2526 = vrot.lane.b32.xlu0 %v2086, 80
          %v2527 = vpop.permute.xlu0 %2526
          %2530 = vrot.lane.b32.xlu0 %v2080, 96
          %v2531 = vpop.permute.xlu0 %2530
          %2534 = vrot.lane.b32.xlu0 %v2088, 112
          %v2535 = vpop.permute.xlu0 %2534
          %2538 = vrot.lane.b32.xlu0 %v2138, 16
          %v2539 = vpop.permute.xlu0 %2538
          %2542 = vrot.lane.b32.xlu0 %v2124, 32
          %v2543 = vpop.permute.xlu0 %2542
          %2546 = vrot.lane.b32.xlu0 %v2140, 48
          %v2547 = vpop.permute.xlu0 %2546
          %2550 = vrot.lane.b32.xlu0 %v2132, 64
          %v2551 = vpop.permute.xlu0 %2550
          %2554 = vrot.lane.b32.xlu0 %v2142, 80
          %v2555 = vpop.permute.xlu0 %2554
          %2558 = vrot.lane.b32.xlu0 %v2136, 96
          %v2559 = vpop.permute.xlu0 %2558
          %2562 = vrot.lane.b32.xlu0 %v2144, 112
          %v2563 = vpop.permute.xlu0 %2562
          %2566 = vrot.lane.b32.xlu0 %v2194, 16
          %v2567 = vpop.permute.xlu0 %2566
          %2570 = vrot.lane.b32.xlu0 %v2180, 32
          %v2571 = vpop.permute.xlu0 %2570
          %2574 = vrot.lane.b32.xlu0 %v2196, 48
          %v2575 = vpop.permute.xlu0 %2574
          %2578 = vrot.lane.b32.xlu0 %v2188, 64
          %v2579 = vpop.permute.xlu0 %2578
          %2582 = vrot.lane.b32.xlu0 %v2198, 80
          %v2583 = vpop.permute.xlu0 %2582
          %2586 = vrot.lane.b32.xlu0 %v2192, 96
          %v2587 = vpop.permute.xlu0 %2586
          %2590 = vrot.lane.b32.xlu0 %v2200, 112
          %v2591 = vpop.permute.xlu0 %2590
          %2594 = vrot.lane.b32.xlu0 %v2250, 16
          %v2595 = vpop.permute.xlu0 %2594
          %2598 = vrot.lane.b32.xlu0 %v2236, 32
          %v2599 = vpop.permute.xlu0 %2598
          %2602 = vrot.lane.b32.xlu0 %v2252, 48
          %v2603 = vpop.permute.xlu0 %2602
          %2606 = vrot.lane.b32.xlu0 %v2244, 64
          %v2607 = vpop.permute.xlu0 %2606
          %2610 = vrot.lane.b32.xlu0 %v2254, 80
          %v2611 = vpop.permute.xlu0 %2610
          %2614 = vrot.lane.b32.xlu0 %v2248, 96
          %v2615 = vpop.permute.xlu0 %2614
          %2618 = vrot.lane.b32.xlu0 %v2256, 112
          %v2619 = vpop.permute.xlu0 %2618
          %2622 = vrot.lane.b32.xlu0 %v2306, 16
          %v2623 = vpop.permute.xlu0 %2622
          %2626 = vrot.lane.b32.xlu0 %v2292, 32
          %v2627 = vpop.permute.xlu0 %2626
          %2630 = vrot.lane.b32.xlu0 %v2308, 48
          %v2631 = vpop.permute.xlu0 %2630
          %2634 = vrot.lane.b32.xlu0 %v2300, 64
          %v2635 = vpop.permute.xlu0 %2634
          %2638 = vrot.lane.b32.xlu0 %v2310, 80
          %v2639 = vpop.permute.xlu0 %2638
          %2642 = vrot.lane.b32.xlu0 %v2304, 96
          %v2643 = vpop.permute.xlu0 %2642
          %2646 = vrot.lane.b32.xlu0 %v2312, 112
          %v2647 = vpop.permute.xlu0 %2646
          %2650 = vrot.lane.b32.xlu0 %v2362, 16
          %v2651 = vpop.permute.xlu0 %2650
          %2654 = vrot.lane.b32.xlu0 %v2348, 32
          %v2655 = vpop.permute.xlu0 %2654
          %2658 = vrot.lane.b32.xlu0 %v2364, 48
          %v2659 = vpop.permute.xlu0 %2658
          %2662 = vrot.lane.b32.xlu0 %v2356, 64
          %v2663 = vpop.permute.xlu0 %2662
          %2666 = vrot.lane.b32.xlu0 %v2366, 80
          %v2667 = vpop.permute.xlu0 %2666
          %2670 = vrot.lane.b32.xlu0 %v2360, 96
          %v2671 = vpop.permute.xlu0 %2670
          %2674 = vrot.lane.b32.xlu0 %v2368, 112
          %v2675 = vpop.permute.xlu0 %2674
          %2678 = vrot.lane.b32.xlu0 %v2418, 16
          %v2679 = vpop.permute.xlu0 %2678
          %2682 = vrot.lane.b32.xlu0 %v2404, 32
          %v2683 = vpop.permute.xlu0 %2682
          %2686 = vrot.lane.b32.xlu0 %v2420, 48
          %v2687 = vpop.permute.xlu0 %2686
          %2690 = vrot.lane.b32.xlu0 %v2412, 64
          %v2691 = vpop.permute.xlu0 %2690
          %2694 = vrot.lane.b32.xlu0 %v2422, 80
          %v2695 = vpop.permute.xlu0 %2694
          %2698 = vrot.lane.b32.xlu0 %v2416, 96
          %v2699 = vpop.permute.xlu0 %2698
          %2702 = vrot.lane.b32.xlu0 %v2424, 112
          %v2703 = vpop.permute.xlu0 %2702
          %vm2705 = vcmask 130048
          %v2706 = vsel %vm2705, %v1896, %v2427
          %vm2707 = vcmask 261120
          %v2708 = vsel %vm2707, %v2706, %v2431
          %vm2709 = vcmask 392192
          %v2710 = vsel %vm2709, %v2708, %v2435
          %v2711 = vsel %vm653, %v2710, %v2439
          %vm2712 = vcmask 654336
          %v2713 = vsel %vm2712, %v2711, %v2443
          %vm2714 = vcmask 785408
          %v2715 = vsel %vm2714, %v2713, %v2447
          %vm2716 = vcmask 916480
          %v2717 = vsel %vm2716, %v2715, %v2451
          %v2718 = vsel %vm2705, %v1952, %v2455
          %v2719 = vsel %vm2707, %v2718, %v2459
          %v2720 = vsel %vm2709, %v2719, %v2463
          %v2721 = vsel %vm653, %v2720, %v2467
          %v2722 = vsel %vm2712, %v2721, %v2471
          %v2723 = vsel %vm2714, %v2722, %v2475
          %v2724 = vsel %vm2716, %v2723, %v2479
          %v2725 = vsel %vm2705, %v2008, %v2483
          %v2726 = vsel %vm2707, %v2725, %v2487
          %v2727 = vsel %vm2709, %v2726, %v2491
          %v2728 = vsel %vm653, %v2727, %v2495
          %v2729 = vsel %vm2712, %v2728, %v2499
          %v2730 = vsel %vm2714, %v2729, %v2503
          %v2731 = vsel %vm2716, %v2730, %v2507
          %v2732 = vsel %vm2705, %v2064, %v2511
          %v2733 = vsel %vm2707, %v2732, %v2515
          %v2734 = vsel %vm2709, %v2733, %v2519
          %v2735 = vsel %vm653, %v2734, %v2523
          %v2736 = vsel %vm2712, %v2735, %v2527
          %v2737 = vsel %vm2714, %v2736, %v2531
          %v2738 = vsel %vm2716, %v2737, %v2535
          %v2739 = vsel %vm2705, %v2120, %v2539
          %v2740 = vsel %vm2707, %v2739, %v2543
          %v2741 = vsel %vm2709, %v2740, %v2547
          %v2742 = vsel %vm653, %v2741, %v2551
          %v2743 = vsel %vm2712, %v2742, %v2555
          %v2744 = vsel %vm2714, %v2743, %v2559
          %v2745 = vsel %vm2716, %v2744, %v2563
          %v2746 = vsel %vm2705, %v2176, %v2567
          %v2747 = vsel %vm2707, %v2746, %v2571
          %v2748 = vsel %vm2709, %v2747, %v2575
          %v2749 = vsel %vm653, %v2748, %v2579
          %v2750 = vsel %vm2712, %v2749, %v2583
          %v2751 = vsel %vm2714, %v2750, %v2587
          %v2752 = vsel %vm2716, %v2751, %v2591
          %v2753 = vsel %vm2705, %v2232, %v2595
          %v2754 = vsel %vm2707, %v2753, %v2599
          %v2755 = vsel %vm2709, %v2754, %v2603
          %v2756 = vsel %vm653, %v2755, %v2607
          %v2757 = vsel %vm2712, %v2756, %v2611
          %v2758 = vsel %vm2714, %v2757, %v2615
          %v2759 = vsel %vm2716, %v2758, %v2619
          %v2760 = vsel %vm2705, %v2288, %v2623
          %v2761 = vsel %vm2707, %v2760, %v2627
          %v2762 = vsel %vm2709, %v2761, %v2631
          %v2763 = vsel %vm653, %v2762, %v2635
          %v2764 = vsel %vm2712, %v2763, %v2639
          %v2765 = vsel %vm2714, %v2764, %v2643
          %v2766 = vsel %vm2716, %v2765, %v2647
          %v2767 = vsel %vm2705, %v2344, %v2651
          %v2768 = vsel %vm2707, %v2767, %v2655
          %v2769 = vsel %vm2709, %v2768, %v2659
          %v2770 = vsel %vm653, %v2769, %v2663
          %v2771 = vsel %vm2712, %v2770, %v2667
          %v2772 = vsel %vm2714, %v2771, %v2671
          %v2773 = vsel %vm2716, %v2772, %v2675
          %v2774 = vsel %vm2705, %v2400, %v2679
          %v2775 = vsel %vm2707, %v2774, %v2683
          %v2776 = vsel %vm2709, %v2775, %v2687
          %v2777 = vsel %vm653, %v2776, %v2691
          %v2778 = vsel %vm2712, %v2777, %v2695
          %v2779 = vsel %vm2714, %v2778, %v2699
          %v2780 = vsel %vm2716, %v2779, %v2703
          %v2791 = vrot.slane %v2724, 4
          %v2792 = vrot.slane %v2738, 4
          %v2793 = vrot.slane %v2752, 4
          %v2794 = vrot.slane %v2766, 4
          %v2795 = vrot.slane %v2780, 4
          %vm2796 = vcmask 1043456
          %v2797 = vsel %vm2796, %v2717, %v2791
          %v2798 = vsel %vm2796, %v2731, %v2792
          %v2799 = vsel %vm2796, %v2745, %v2793
          %v2800 = vsel %vm2796, %v2759, %v2794
          %v2801 = vsel %vm2796, %v2773, %v2795
          %2807 = vst [vmem:[#allocation2] sm:$0xff] %v2797
          %2808 = vst [vmem:[#allocation2 + $0x8] sm:$0xff] %v2798
          %2809 = vst [vmem:[#allocation2 + $0x10] sm:$0xff] %v2799
          %2810 = vst [vmem:[#allocation2 + $0x18] sm:$0xff] %v2800
          %2811 = vst [vmem:[#allocation2 + $0x20] sm:$0xff] %v2801
        $region48: #{network_forward.1} parent=35 // pred_fallthru
          _
        %v2812 = vld [vmem:[#allocation2] sm:$0xff]
        %v2813 = vld [vmem:[#allocation2 + $0x8] sm:$0xff]
        %v2814 = vld [vmem:[#allocation2 + $0x10] sm:$0xff]
        %v2815 = vld [vmem:[#allocation2 + $0x18] sm:$0xff]
        %v2816 = vld [vmem:[#allocation2 + $0x20] sm:$0xff]
        %v2817 = vld [vmem:[%s231] sm:$0xf]
        %v2818 = vld [vmem:[%s231 + $0x4] sm:$0xf]
        %v2819 = vld [vmem:[%s231 + $0x8] sm:$0xf]
        %v2820 = vld [vmem:[%s231 + $0xc] sm:$0xf]
        %v2821 = vld [vmem:[%s231 + $0x10] sm:$0xf]
        %v2822 = vld [vmem:[%s231 + $0x14] sm:$0xf]
        %v2823 = vld [vmem:[%s231 + $0x18] sm:$0xf]
        %v2824 = vld [vmem:[%s231 + $0x1c] sm:$0xf]
        %v2825 = vld [vmem:[%s231 + $0x20] sm:$0xf]
        %v2826 = vld [vmem:[%s231 + $0x24] sm:$0xf]
        %v2827 = vld [vmem:[%s231 + $0x28] sm:$0xf]
        %v2828 = vld [vmem:[%s231 + $0x2c] sm:$0xf]
        %v2829 = vld [vmem:[%s231 + $0x30] sm:$0xf]
        %v2830 = vld [vmem:[%s231 + $0x34] sm:$0xf]
        %v2831 = vld [vmem:[%s231 + $0x38] sm:$0xf]
        %v2832 = vld [vmem:[%s231 + $0x3c] sm:$0xf]
        %v2833 = vld [vmem:[%s231 + $0x40] sm:$0xf]
        %v2834 = vld [vmem:[%s231 + $0x44] sm:$0xf]
        %v2835 = vld [vmem:[%s231 + $0x48] sm:$0xf]
        %v2836 = vld [vmem:[%s231 + $0x4c] sm:$0xf]
        %v2837 = vld [vmem:[%s231 + $0x50] sm:$0xf]
        %v2838 = vld [vmem:[%s231 + $0x54] sm:$0xf]
        %v2839 = vld [vmem:[%s231 + $0x58] sm:$0xf]
        %v2840 = vld [vmem:[%s231 + $0x5c] sm:$0xf]
        %v2841 = vld [vmem:[%s231 + $0x60] sm:$0xf]
        %v2842 = vld [vmem:[%s231 + $0x64] sm:$0xf]
        %v2843 = vld [vmem:[%s231 + $0x68] sm:$0xf]
        %v2844 = vld [vmem:[%s231 + $0x6c] sm:$0xf]
        %v2845 = vld [vmem:[%s231 + $0x70] sm:$0xf]
        %v2846 = vld [vmem:[%s231 + $0x74] sm:$0xf]
        %v2847 = vld [vmem:[%s231 + $0x78] sm:$0xf]
        %v2848 = vld [vmem:[%s231 + $0x7c] sm:$0xf]
        %v2849 = vld [vmem:[%s231 + $0x80] sm:$0xf]
        %v2850 = vld [vmem:[%s231 + $0x84] sm:$0xf]
        %v2851 = vld [vmem:[%s231 + $0x88] sm:$0xf]
        %v2852 = vld [vmem:[%s231 + $0x8c] sm:$0xf]
        %v2853 = vld [vmem:[%s231 + $0x90] sm:$0xf]
        %v2854 = vld [vmem:[%s231 + $0x94] sm:$0xf]
        %v2855 = vld [vmem:[%s231 + $0x98] sm:$0xf]
        %v2856 = vld [vmem:[%s231 + $0x9c] sm:$0xf]
        %v2857 = vld [vmem:[%s231 + $0xa0] sm:$0xf]
        %v2858 = vld [vmem:[%s231 + $0xa4] sm:$0xf]
        %v2859 = vld [vmem:[%s231 + $0xa8] sm:$0xf]
        %v2860 = vld [vmem:[%s231 + $0xac] sm:$0xf]
        %v2861 = vld [vmem:[%s231 + $0xb0] sm:$0xf]
        %v2862 = vld [vmem:[%s231 + $0xb4] sm:$0xf]
        %v2863 = vld [vmem:[%s231 + $0xb8] sm:$0xf]
        %v2864 = vld [vmem:[%s231 + $0xbc] sm:$0xf]
        %v2865 = vld [vmem:[%s231 + $0xc0] sm:$0xf]
        %v2866 = vld [vmem:[%s231 + $0xc4] sm:$0xf]
        %v2867 = vld [vmem:[%s231 + $0xc8] sm:$0xf]
        %v2868 = vld [vmem:[%s231 + $0xcc] sm:$0xf]
        %v2869 = vld [vmem:[%s231 + $0xd0] sm:$0xf]
        %v2870 = vld [vmem:[%s231 + $0xd4] sm:$0xf]
        %v2871 = vld [vmem:[%s231 + $0xd8] sm:$0xf]
        %v2872 = vld [vmem:[%s231 + $0xdc] sm:$0xf]
        %v2873 = vld [vmem:[%s231 + $0xe0] sm:$0xf]
        %v2874 = vld [vmem:[%s231 + $0xe4] sm:$0xf]
        %v2875 = vld [vmem:[%s231 + $0xe8] sm:$0xf]
        %v2876 = vld [vmem:[%s231 + $0xec] sm:$0xf]
        %v2877 = vld [vmem:[%s231 + $0xf0] sm:$0xf]
        %v2878 = vld [vmem:[%s231 + $0xf4] sm:$0xf]
        %v2879 = vld [vmem:[%s231 + $0xf8] sm:$0xf]
        %v2880 = vld [vmem:[%s231 + $0xfc] sm:$0xf]
        %v2881 = vld [vmem:[%s231 + $0x100] sm:$0xf]
        %v2882 = vld [vmem:[%s231 + $0x104] sm:$0xf]
        %v2883 = vld [vmem:[%s231 + $0x108] sm:$0xf]
        %v2884 = vld [vmem:[%s231 + $0x10c] sm:$0xf]
        %v2885 = vld [vmem:[%s231 + $0x110] sm:$0xf]
        %v2886 = vld [vmem:[%s231 + $0x114] sm:$0xf]
        %v2887 = vld [vmem:[%s231 + $0x118] sm:$0xf]
        %v2888 = vld [vmem:[%s231 + $0x11c] sm:$0xf]
        %v2889 = vld [vmem:[%s231 + $0x120] sm:$0xf]
        %v2890 = vld [vmem:[%s231 + $0x124] sm:$0xf]
        %v2891 = vld [vmem:[%s231 + $0x128] sm:$0xf]
        %v2892 = vld [vmem:[%s231 + $0x12c] sm:$0xf]
        %v2893 = vld [vmem:[%s231 + $0x130] sm:$0xf]
        %v2894 = vld [vmem:[%s231 + $0x134] sm:$0xf]
        %v2895 = vld [vmem:[%s231 + $0x138] sm:$0xf]
        %v2896 = vld [vmem:[%s231 + $0x13c] sm:$0xf]
        %v2897 = vld [vmem:[%s231 + $0x140] sm:$0xf]
        %v2898 = vld [vmem:[%s231 + $0x144] sm:$0xf]
        %v2899 = vld [vmem:[%s231 + $0x148] sm:$0xf]
        %v2900 = vld [vmem:[%s231 + $0x14c] sm:$0xf]
        %v2901 = vld [vmem:[%s231 + $0x150] sm:$0xf]
        %v2902 = vld [vmem:[%s231 + $0x154] sm:$0xf]
        %v2903 = vld [vmem:[%s231 + $0x158] sm:$0xf]
        %v2904 = vld [vmem:[%s231 + $0x15c] sm:$0xf]
        %v2905 = vld [vmem:[%s231 + $0x160] sm:$0xf]
        %v2906 = vld [vmem:[%s231 + $0x164] sm:$0xf]
        %v2907 = vld [vmem:[%s231 + $0x168] sm:$0xf]
        %v2908 = vld [vmem:[%s231 + $0x16c] sm:$0xf]
        %v2909 = vld [vmem:[%s231 + $0x170] sm:$0xf]
        %v2910 = vld [vmem:[%s231 + $0x174] sm:$0xf]
        %v2911 = vld [vmem:[%s231 + $0x178] sm:$0xf]
        %v2912 = vld [vmem:[%s231 + $0x17c] sm:$0xf]
        %v2913 = vld [vmem:[%s231 + $0x180] sm:$0xf]
        %v2914 = vld [vmem:[%s231 + $0x184] sm:$0xf]
        %v2915 = vld [vmem:[%s231 + $0x188] sm:$0xf]
        %v2916 = vld [vmem:[%s231 + $0x18c] sm:$0xf]
        %v2917 = vld [vmem:[%s231 + $0x190] sm:$0xf]
        %v2918 = vld [vmem:[%s231 + $0x194] sm:$0xf]
        %v2919 = vld [vmem:[%s231 + $0x198] sm:$0xf]
        %v2920 = vld [vmem:[%s231 + $0x19c] sm:$0xf]
        %v2921 = vld [vmem:[%s231 + $0x1a0] sm:$0xf]
        %v2922 = vld [vmem:[%s231 + $0x1a4] sm:$0xf]
        %v2923 = vld [vmem:[%s231 + $0x1a8] sm:$0xf]
        %v2924 = vld [vmem:[%s231 + $0x1ac] sm:$0xf]
        %v2925 = vld [vmem:[%s231 + $0x1b0] sm:$0xf]
        %v2926 = vld [vmem:[%s231 + $0x1b4] sm:$0xf]
        %v2927 = vld [vmem:[%s231 + $0x1b8] sm:$0xf]
        %v2928 = vld [vmem:[%s231 + $0x1bc] sm:$0xf]
        %v2929 = vld [vmem:[%s231 + $0x1c0] sm:$0xf]
        %v2930 = vld [vmem:[%s231 + $0x1c4] sm:$0xf]
        %v2931 = vld [vmem:[%s231 + $0x1c8] sm:$0xf]
        %v2932 = vld [vmem:[%s231 + $0x1cc] sm:$0xf]
        %v2933 = vld [vmem:[%s231 + $0x1d0] sm:$0xf]
        %v2934 = vld [vmem:[%s231 + $0x1d4] sm:$0xf]
        %v2935 = vld [vmem:[%s231 + $0x1d8] sm:$0xf]
        %v2936 = vld [vmem:[%s231 + $0x1dc] sm:$0xf]
        %v2937 = vld [vmem:[%s231 + $0x1e0] sm:$0xf]
        %v2938 = vld [vmem:[%s231 + $0x1e4] sm:$0xf]
        %v2939 = vld [vmem:[%s231 + $0x1e8] sm:$0xf]
        %v2940 = vld [vmem:[%s231 + $0x1ec] sm:$0xf]
        %v2941 = vld [vmem:[%s231 + $0x1f0] sm:$0xf]
        %v2942 = vld [vmem:[%s231 + $0x1f4] sm:$0xf]
        %v2943 = vld [vmem:[%s231 + $0x1f8] sm:$0xf]
        %v2944 = vld [vmem:[%s231 + $0x1fc] sm:$0xf]
        %v2945 = vld [vmem:[%s231 + $0x200] sm:$0xf]
        %v2946 = vld [vmem:[%s231 + $0x204] sm:$0xf]
        %v2947 = vld [vmem:[%s231 + $0x208] sm:$0xf]
        %v2948 = vld [vmem:[%s231 + $0x20c] sm:$0xf]
        %v2949 = vld [vmem:[%s231 + $0x210] sm:$0xf]
        %v2950 = vld [vmem:[%s231 + $0x214] sm:$0xf]
        %v2951 = vld [vmem:[%s231 + $0x218] sm:$0xf]
        %v2952 = vld [vmem:[%s231 + $0x21c] sm:$0xf]
        %v2953 = vld [vmem:[%s231 + $0x220] sm:$0xf]
        %v2954 = vld [vmem:[%s231 + $0x224] sm:$0xf]
        %v2955 = vld [vmem:[%s231 + $0x228] sm:$0xf]
        %v2956 = vld [vmem:[%s231 + $0x22c] sm:$0xf]
        %v2957 = vld [vmem:[%s231 + $0x230] sm:$0xf]
        %v2958 = vld [vmem:[%s231 + $0x234] sm:$0xf]
        %v2959 = vld [vmem:[%s231 + $0x238] sm:$0xf]
        %v2960 = vld [vmem:[%s231 + $0x23c] sm:$0xf]
        %v2961 = vld [vmem:[%s231 + $0x240] sm:$0xf]
        %v2962 = vld [vmem:[%s231 + $0x244] sm:$0xf]
        %v2963 = vld [vmem:[%s231 + $0x248] sm:$0xf]
        %v2964 = vld [vmem:[%s231 + $0x24c] sm:$0xf]
        %v2965 = vld [vmem:[%s231 + $0x250] sm:$0xf]
        %v2966 = vld [vmem:[%s231 + $0x254] sm:$0xf]
        %v2967 = vld [vmem:[%s231 + $0x258] sm:$0xf]
        %v2968 = vld [vmem:[%s231 + $0x25c] sm:$0xf]
        %v2969 = vld [vmem:[%s231 + $0x260] sm:$0xf]
        %v2970 = vld [vmem:[%s231 + $0x264] sm:$0xf]
        %v2971 = vld [vmem:[%s231 + $0x268] sm:$0xf]
        %v2972 = vld [vmem:[%s231 + $0x26c] sm:$0xf]
        %v2973 = vld [vmem:[%s231 + $0x270] sm:$0xf]
        %v2974 = vld [vmem:[%s231 + $0x274] sm:$0xf]
        %v2975 = vld [vmem:[%s231 + $0x278] sm:$0xf]
        %v2976 = vld [vmem:[%s231 + $0x27c] sm:$0xf]
        %v2977 = vunpack.c.l.bf16 %v2817
        %v2978 = vunpack.c.l.bf16 %v2818
        %v2979 = vunpack.c.l.bf16 %v2819
        %v2980 = vunpack.c.l.bf16 %v2820
        %v2981 = vunpack.c.l.bf16 %v2821
        %v2982 = vunpack.c.l.bf16 %v2822
        %v2983 = vunpack.c.l.bf16 %v2823
        %v2984 = vunpack.c.l.bf16 %v2824
        %v2985 = vunpack.c.l.bf16 %v2825
        %v2986 = vunpack.c.l.bf16 %v2826
        %v2987 = vunpack.c.l.bf16 %v2827
        %v2988 = vunpack.c.l.bf16 %v2828
        %v2989 = vunpack.c.l.bf16 %v2829
        %v2990 = vunpack.c.l.bf16 %v2830
        %v2991 = vunpack.c.l.bf16 %v2831
        %v2992 = vunpack.c.l.bf16 %v2832
        %v2993 = vunpack.c.l.bf16 %v2833
        %v2994 = vunpack.c.l.bf16 %v2834
        %v2995 = vunpack.c.l.bf16 %v2835
        %v2996 = vunpack.c.l.bf16 %v2836
        %v2997 = vunpack.c.l.bf16 %v2837
        %v2998 = vunpack.c.l.bf16 %v2838
        %v2999 = vunpack.c.l.bf16 %v2839
        %v3000 = vunpack.c.l.bf16 %v2840
        %v3001 = vunpack.c.l.bf16 %v2841
        %v3002 = vunpack.c.l.bf16 %v2842
        %v3003 = vunpack.c.l.bf16 %v2843
        %v3004 = vunpack.c.l.bf16 %v2844
        %v3005 = vunpack.c.l.bf16 %v2845
        %v3006 = vunpack.c.l.bf16 %v2846
        %v3007 = vunpack.c.l.bf16 %v2847
        %v3008 = vunpack.c.l.bf16 %v2848
        %v3009 = vunpack.c.l.bf16 %v2849
        %v3010 = vunpack.c.l.bf16 %v2850
        %v3011 = vunpack.c.l.bf16 %v2851
        %v3012 = vunpack.c.l.bf16 %v2852
        %v3013 = vunpack.c.l.bf16 %v2853
        %v3014 = vunpack.c.l.bf16 %v2854
        %v3015 = vunpack.c.l.bf16 %v2855
        %v3016 = vunpack.c.l.bf16 %v2856
        %v3017 = vunpack.c.l.bf16 %v2857
        %v3018 = vunpack.c.l.bf16 %v2858
        %v3019 = vunpack.c.l.bf16 %v2859
        %v3020 = vunpack.c.l.bf16 %v2860
        %v3021 = vunpack.c.l.bf16 %v2861
        %v3022 = vunpack.c.l.bf16 %v2862
        %v3023 = vunpack.c.l.bf16 %v2863
        %v3024 = vunpack.c.l.bf16 %v2864
        %v3025 = vunpack.c.l.bf16 %v2865
        %v3026 = vunpack.c.l.bf16 %v2866
        %v3027 = vunpack.c.l.bf16 %v2867
        %v3028 = vunpack.c.l.bf16 %v2868
        %v3029 = vunpack.c.l.bf16 %v2869
        %v3030 = vunpack.c.l.bf16 %v2870
        %v3031 = vunpack.c.l.bf16 %v2871
        %v3032 = vunpack.c.l.bf16 %v2872
        %v3033 = vunpack.c.l.bf16 %v2873
        %v3034 = vunpack.c.l.bf16 %v2874
        %v3035 = vunpack.c.l.bf16 %v2875
        %v3036 = vunpack.c.l.bf16 %v2876
        %v3037 = vunpack.c.l.bf16 %v2877
        %v3038 = vunpack.c.l.bf16 %v2878
        %v3039 = vunpack.c.l.bf16 %v2879
        %v3040 = vunpack.c.l.bf16 %v2880
        %v3041 = vunpack.c.l.bf16 %v2881
        %v3042 = vunpack.c.l.bf16 %v2882
        %v3043 = vunpack.c.l.bf16 %v2883
        %v3044 = vunpack.c.l.bf16 %v2884
        %v3045 = vunpack.c.l.bf16 %v2885
        %v3046 = vunpack.c.l.bf16 %v2886
        %v3047 = vunpack.c.l.bf16 %v2887
        %v3048 = vunpack.c.l.bf16 %v2888
        %v3049 = vunpack.c.l.bf16 %v2889
        %v3050 = vunpack.c.l.bf16 %v2890
        %v3051 = vunpack.c.l.bf16 %v2891
        %v3052 = vunpack.c.l.bf16 %v2892
        %v3053 = vunpack.c.l.bf16 %v2893
        %v3054 = vunpack.c.l.bf16 %v2894
        %v3055 = vunpack.c.l.bf16 %v2895
        %v3056 = vunpack.c.l.bf16 %v2896
        %v3057 = vunpack.c.l.bf16 %v2897
        %v3058 = vunpack.c.l.bf16 %v2898
        %v3059 = vunpack.c.l.bf16 %v2899
        %v3060 = vunpack.c.l.bf16 %v2900
        %v3061 = vunpack.c.l.bf16 %v2901
        %v3062 = vunpack.c.l.bf16 %v2902
        %v3063 = vunpack.c.l.bf16 %v2903
        %v3064 = vunpack.c.l.bf16 %v2904
        %v3065 = vunpack.c.l.bf16 %v2905
        %v3066 = vunpack.c.l.bf16 %v2906
        %v3067 = vunpack.c.l.bf16 %v2907
        %v3068 = vunpack.c.l.bf16 %v2908
        %v3069 = vunpack.c.l.bf16 %v2909
        %v3070 = vunpack.c.l.bf16 %v2910
        %v3071 = vunpack.c.l.bf16 %v2911
        %v3072 = vunpack.c.l.bf16 %v2912
        %v3073 = vunpack.c.l.bf16 %v2913
        %v3074 = vunpack.c.l.bf16 %v2914
        %v3075 = vunpack.c.l.bf16 %v2915
        %v3076 = vunpack.c.l.bf16 %v2916
        %v3077 = vunpack.c.l.bf16 %v2917
        %v3078 = vunpack.c.l.bf16 %v2918
        %v3079 = vunpack.c.l.bf16 %v2919
        %v3080 = vunpack.c.l.bf16 %v2920
        %v3081 = vunpack.c.l.bf16 %v2921
        %v3082 = vunpack.c.l.bf16 %v2922
        %v3083 = vunpack.c.l.bf16 %v2923
        %v3084 = vunpack.c.l.bf16 %v2924
        %v3085 = vunpack.c.l.bf16 %v2925
        %v3086 = vunpack.c.l.bf16 %v2926
        %v3087 = vunpack.c.l.bf16 %v2927
        %v3088 = vunpack.c.l.bf16 %v2928
        %v3089 = vunpack.c.l.bf16 %v2929
        %v3090 = vunpack.c.l.bf16 %v2930
        %v3091 = vunpack.c.l.bf16 %v2931
        %v3092 = vunpack.c.l.bf16 %v2932
        %v3093 = vunpack.c.l.bf16 %v2933
        %v3094 = vunpack.c.l.bf16 %v2934
        %v3095 = vunpack.c.l.bf16 %v2935
        %v3096 = vunpack.c.l.bf16 %v2936
        %v3097 = vunpack.c.l.bf16 %v2937
        %v3098 = vunpack.c.l.bf16 %v2938
        %v3099 = vunpack.c.l.bf16 %v2939
        %v3100 = vunpack.c.l.bf16 %v2940
        %v3101 = vunpack.c.l.bf16 %v2941
        %v3102 = vunpack.c.l.bf16 %v2942
        %v3103 = vunpack.c.l.bf16 %v2943
        %v3104 = vunpack.c.l.bf16 %v2944
        %v3105 = vunpack.c.l.bf16 %v2945
        %v3106 = vunpack.c.l.bf16 %v2946
        %v3107 = vunpack.c.l.bf16 %v2947
        %v3108 = vunpack.c.l.bf16 %v2948
        %v3109 = vunpack.c.l.bf16 %v2949
        %v3110 = vunpack.c.l.bf16 %v2950
        %v3111 = vunpack.c.l.bf16 %v2951
        %v3112 = vunpack.c.l.bf16 %v2952
        %v3113 = vunpack.c.l.bf16 %v2953
        %v3114 = vunpack.c.l.bf16 %v2954
        %v3115 = vunpack.c.l.bf16 %v2955
        %v3116 = vunpack.c.l.bf16 %v2956
        %v3117 = vunpack.c.l.bf16 %v2957
        %v3118 = vunpack.c.l.bf16 %v2958
        %v3119 = vunpack.c.l.bf16 %v2959
        %v3120 = vunpack.c.l.bf16 %v2960
        %v3121 = vunpack.c.l.bf16 %v2961
        %v3122 = vunpack.c.l.bf16 %v2962
        %v3123 = vunpack.c.l.bf16 %v2963
        %v3124 = vunpack.c.l.bf16 %v2964
        %v3125 = vunpack.c.l.bf16 %v2965
        %v3126 = vunpack.c.l.bf16 %v2966
        %v3127 = vunpack.c.l.bf16 %v2967
        %v3128 = vunpack.c.l.bf16 %v2968
        %v3129 = vunpack.c.l.bf16 %v2969
        %v3130 = vunpack.c.l.bf16 %v2970
        %v3131 = vunpack.c.l.bf16 %v2971
        %v3132 = vunpack.c.l.bf16 %v2972
        %v3133 = vunpack.c.l.bf16 %v2973
        %v3134 = vunpack.c.l.bf16 %v2974
        %v3135 = vunpack.c.l.bf16 %v2975
        %v3136 = vunpack.c.l.bf16 %v2976
        %3142 = vst [vmem:[#allocation1] ss:$2 sm:$0xff] %v2812
        %s3143 = scalar_lea.vmem [#allocation1], 16
        %3144 = vst [vmem:[%s3143] ss:$2 sm:$0xff] %v2813
        %s3145 = scalar_lea.vmem [#allocation1], 32
        %3146 = vst [vmem:[%s3145] ss:$2 sm:$0xff] %v2814
        %s3147 = scalar_lea.vmem [#allocation1], 48
        %3148 = vst [vmem:[%s3147] ss:$2 sm:$0xff] %v2815
        %v3149 = vld.sshfl [vmem:[#allocation1] sm:$0xff pattern:$0x75316420]
        %v3150 = vld.sshfl [vmem:[#allocation1 + $0x8] sm:$0xff pattern:$0x75316420]
        %v3151 = vld.sshfl [vmem:[#allocation1 + $0x10] sm:$0xff pattern:$0x75316420]
        %v3152 = vld.sshfl [vmem:[#allocation1 + $0x18] sm:$0xff pattern:$0x75316420]
        %v3153 = vld.sshfl [vmem:[#allocation1 + $0x20] sm:$0xff pattern:$0x75316420]
        %v3154 = vld.sshfl [vmem:[#allocation1 + $0x28] sm:$0xff pattern:$0x75316420]
        %v3155 = vld.sshfl [vmem:[#allocation1 + $0x30] sm:$0xff pattern:$0x75316420]
        %v3156 = vld.sshfl [vmem:[#allocation1 + $0x38] sm:$0xff pattern:$0x75316420]
        %3157 = vst [vmem:[#allocation1] ss:$2 sm:$0xff] %v2816
        %v3158 = vld.sshfl [vmem:[#allocation1] sm:$0xff pattern:$0x75316420]
        %v3159 = vld.sshfl [vmem:[#allocation1 + $0x8] sm:$0xff pattern:$0x75316420]
        %3170 = vmatpush.msra.mxu0 %v2992
        %3171 = vmatpush.msra.mxu0 %v2991
        %3172 = vmatpush.msra.mxu0 %v2990
        %3173 = vmatpush.msra.mxu0 %v2989
        %3174 = vmatpush.msra.mxu0 %v2988
        %3175 = vmatpush.msra.mxu0 %v2987
        %3176 = vmatpush.msra.mxu0 %v2986
        %3177 = vmatpush.msra.mxu0 %v2985
        %3178 = vmatpush.msra.mxu0 %v2984
        %3179 = vmatpush.msra.mxu0 %v2983
        %3180 = vmatpush.msra.mxu0 %v2982
        %3181 = vmatpush.msra.mxu0 %v2981
        %3182 = vmatpush.msra.mxu0 %v2980
        %3183 = vmatpush.msra.mxu0 %v2979
        %3184 = vmatpush.msra.mxu0 %v2978
        %3185 = vmatpush.msra.mxu0 %v2977
        %3186 = vmatmul.f32.gmra.mxu0 %v3149
        %v3187 = vpop.f32.mrf.mxu0
        %v3188 = vadd.f32 0.0, %v3187
        %3189 = vdwg.mxu0
        %3190 = vmatpush.msra.mxu0 %v3008
        %3191 = vmatpush.msra.mxu0 %v3007
        %3192 = vmatpush.msra.mxu0 %v3006
        %3193 = vmatpush.msra.mxu0 %v3005
        %3194 = vmatpush.msra.mxu0 %v3004
        %3195 = vmatpush.msra.mxu0 %v3003
        %3196 = vmatpush.msra.mxu0 %v3002
        %3197 = vmatpush.msra.mxu0 %v3001
        %3198 = vmatpush.msra.mxu0 %v3000
        %3199 = vmatpush.msra.mxu0 %v2999
        %3200 = vmatpush.msra.mxu0 %v2998
        %3201 = vmatpush.msra.mxu0 %v2997
        %3202 = vmatpush.msra.mxu0 %v2996
        %3203 = vmatpush.msra.mxu0 %v2995
        %3204 = vmatpush.msra.mxu0 %v2994
        %3205 = vmatpush.msra.mxu0 %v2993
        %3206 = vmatmul.f32.gmra.mxu0 %v3150
        %v3207 = vpop.f32.mrf.mxu0
        %v3208 = vadd.f32 %v3188, %v3207
        %3209 = vdwg.mxu0
        %3210 = vmatpush.msra.mxu0 %v3024
        %3211 = vmatpush.msra.mxu0 %v3023
        %3212 = vmatpush.msra.mxu0 %v3022
        %3213 = vmatpush.msra.mxu0 %v3021
        %3214 = vmatpush.msra.mxu0 %v3020
        %3215 = vmatpush.msra.mxu0 %v3019
        %3216 = vmatpush.msra.mxu0 %v3018
        %3217 = vmatpush.msra.mxu0 %v3017
        %3218 = vmatpush.msra.mxu0 %v3016
        %3219 = vmatpush.msra.mxu0 %v3015
        %3220 = vmatpush.msra.mxu0 %v3014
        %3221 = vmatpush.msra.mxu0 %v3013
        %3222 = vmatpush.msra.mxu0 %v3012
        %3223 = vmatpush.msra.mxu0 %v3011
        %3224 = vmatpush.msra.mxu0 %v3010
        %3225 = vmatpush.msra.mxu0 %v3009
        %3226 = vmatmul.f32.gmra.mxu0 %v3151
        %v3227 = vpop.f32.mrf.mxu0
        %v3228 = vadd.f32 %v3208, %v3227
        %3229 = vdwg.mxu0
        %3230 = vmatpush.msra.mxu0 %v3040
        %3231 = vmatpush.msra.mxu0 %v3039
        %3232 = vmatpush.msra.mxu0 %v3038
        %3233 = vmatpush.msra.mxu0 %v3037
        %3234 = vmatpush.msra.mxu0 %v3036
        %3235 = vmatpush.msra.mxu0 %v3035
        %3236 = vmatpush.msra.mxu0 %v3034
        %3237 = vmatpush.msra.mxu0 %v3033
        %3238 = vmatpush.msra.mxu0 %v3032
        %3239 = vmatpush.msra.mxu0 %v3031
        %3240 = vmatpush.msra.mxu0 %v3030
        %3241 = vmatpush.msra.mxu0 %v3029
        %3242 = vmatpush.msra.mxu0 %v3028
        %3243 = vmatpush.msra.mxu0 %v3027
        %3244 = vmatpush.msra.mxu0 %v3026
        %3245 = vmatpush.msra.mxu0 %v3025
        %3246 = vmatmul.f32.gmra.mxu0 %v3152
        %v3247 = vpop.f32.mrf.mxu0
        %v3248 = vadd.f32 %v3228, %v3247
        %3249 = vdwg.mxu0
        %3250 = vmatpush.msra.mxu0 %v3056
        %3251 = vmatpush.msra.mxu0 %v3055
        %3252 = vmatpush.msra.mxu0 %v3054
        %3253 = vmatpush.msra.mxu0 %v3053
        %3254 = vmatpush.msra.mxu0 %v3052
        %3255 = vmatpush.msra.mxu0 %v3051
        %3256 = vmatpush.msra.mxu0 %v3050
        %3257 = vmatpush.msra.mxu0 %v3049
        %3258 = vmatpush.msra.mxu0 %v3048
        %3259 = vmatpush.msra.mxu0 %v3047
        %3260 = vmatpush.msra.mxu0 %v3046
        %3261 = vmatpush.msra.mxu0 %v3045
        %3262 = vmatpush.msra.mxu0 %v3044
        %3263 = vmatpush.msra.mxu0 %v3043
        %3264 = vmatpush.msra.mxu0 %v3042
        %3265 = vmatpush.msra.mxu0 %v3041
        %3266 = vmatmul.f32.gmra.mxu0 %v3153
        %v3267 = vpop.f32.mrf.mxu0
        %v3268 = vadd.f32 %v3248, %v3267
        %3269 = vdwg.mxu0
        %3270 = vmatpush.msra.mxu0 %v3072
        %3271 = vmatpush.msra.mxu0 %v3071
        %3272 = vmatpush.msra.mxu0 %v3070
        %3273 = vmatpush.msra.mxu0 %v3069
        %3274 = vmatpush.msra.mxu0 %v3068
        %3275 = vmatpush.msra.mxu0 %v3067
        %3276 = vmatpush.msra.mxu0 %v3066
        %3277 = vmatpush.msra.mxu0 %v3065
        %3278 = vmatpush.msra.mxu0 %v3064
        %3279 = vmatpush.msra.mxu0 %v3063
        %3280 = vmatpush.msra.mxu0 %v3062
        %3281 = vmatpush.msra.mxu0 %v3061
        %3282 = vmatpush.msra.mxu0 %v3060
        %3283 = vmatpush.msra.mxu0 %v3059
        %3284 = vmatpush.msra.mxu0 %v3058
        %3285 = vmatpush.msra.mxu0 %v3057
        %3286 = vmatmul.f32.gmra.mxu0 %v3154
        %v3287 = vpop.f32.mrf.mxu0
        %v3288 = vadd.f32 %v3268, %v3287
        %3289 = vdwg.mxu0
        %3290 = vmatpush.msra.mxu0 %v3088
        %3291 = vmatpush.msra.mxu0 %v3087
        %3292 = vmatpush.msra.mxu0 %v3086
        %3293 = vmatpush.msra.mxu0 %v3085
        %3294 = vmatpush.msra.mxu0 %v3084
        %3295 = vmatpush.msra.mxu0 %v3083
        %3296 = vmatpush.msra.mxu0 %v3082
        %3297 = vmatpush.msra.mxu0 %v3081
        %3298 = vmatpush.msra.mxu0 %v3080
        %3299 = vmatpush.msra.mxu0 %v3079
        %3300 = vmatpush.msra.mxu0 %v3078
        %3301 = vmatpush.msra.mxu0 %v3077
        %3302 = vmatpush.msra.mxu0 %v3076
        %3303 = vmatpush.msra.mxu0 %v3075
        %3304 = vmatpush.msra.mxu0 %v3074
        %3305 = vmatpush.msra.mxu0 %v3073
        %3306 = vmatmul.f32.gmra.mxu0 %v3155
        %v3307 = vpop.f32.mrf.mxu0
        %v3308 = vadd.f32 %v3288, %v3307
        %3309 = vdwg.mxu0
        %3310 = vmatpush.msra.mxu0 %v3104
        %3311 = vmatpush.msra.mxu0 %v3103
        %3312 = vmatpush.msra.mxu0 %v3102
        %3313 = vmatpush.msra.mxu0 %v3101
        %3314 = vmatpush.msra.mxu0 %v3100
        %3315 = vmatpush.msra.mxu0 %v3099
        %3316 = vmatpush.msra.mxu0 %v3098
        %3317 = vmatpush.msra.mxu0 %v3097
        %3318 = vmatpush.msra.mxu0 %v3096
        %3319 = vmatpush.msra.mxu0 %v3095
        %3320 = vmatpush.msra.mxu0 %v3094
        %3321 = vmatpush.msra.mxu0 %v3093
        %3322 = vmatpush.msra.mxu0 %v3092
        %3323 = vmatpush.msra.mxu0 %v3091
        %3324 = vmatpush.msra.mxu0 %v3090
        %3325 = vmatpush.msra.mxu0 %v3089
        %3326 = vmatmul.f32.gmra.mxu0 %v3156
        %v3327 = vpop.f32.mrf.mxu0
        %v3328 = vadd.f32 %v3308, %v3327
        %3329 = vdwg.mxu0
        %3330 = vmatpush.msra.mxu0 %v3120
        %3331 = vmatpush.msra.mxu0 %v3119
        %3332 = vmatpush.msra.mxu0 %v3118
        %3333 = vmatpush.msra.mxu0 %v3117
        %3334 = vmatpush.msra.mxu0 %v3116
        %3335 = vmatpush.msra.mxu0 %v3115
        %3336 = vmatpush.msra.mxu0 %v3114
        %3337 = vmatpush.msra.mxu0 %v3113
        %3338 = vmatpush.msra.mxu0 %v3112
        %3339 = vmatpush.msra.mxu0 %v3111
        %3340 = vmatpush.msra.mxu0 %v3110
        %3341 = vmatpush.msra.mxu0 %v3109
        %3342 = vmatpush.msra.mxu0 %v3108
        %3343 = vmatpush.msra.mxu0 %v3107
        %3344 = vmatpush.msra.mxu0 %v3106
        %3345 = vmatpush.msra.mxu0 %v3105
        %3346 = vmatmul.f32.gmra.mxu0 %v3158
        %v3347 = vpop.f32.mrf.mxu0
        %v3348 = vadd.f32 %v3328, %v3347
        %3349 = vdwg.mxu0
        %3350 = vmatpush.msra.mxu0 %v3136
        %3351 = vmatpush.msra.mxu0 %v3135
        %3352 = vmatpush.msra.mxu0 %v3134
        %3353 = vmatpush.msra.mxu0 %v3133
        %3354 = vmatpush.msra.mxu0 %v3132
        %3355 = vmatpush.msra.mxu0 %v3131
        %3356 = vmatpush.msra.mxu0 %v3130
        %3357 = vmatpush.msra.mxu0 %v3129
        %3358 = vmatpush.msra.mxu0 %v3128
        %3359 = vmatpush.msra.mxu0 %v3127
        %3360 = vmatpush.msra.mxu0 %v3126
        %3361 = vmatpush.msra.mxu0 %v3125
        %3362 = vmatpush.msra.mxu0 %v3124
        %3363 = vmatpush.msra.mxu0 %v3123
        %3364 = vmatpush.msra.mxu0 %v3122
        %3365 = vmatpush.msra.mxu0 %v3121
        %3366 = vmatmul.f32.gmra.mxu0 %v3159
        %v3367 = vpop.f32.mrf.mxu0
        %v3368 = vadd.f32 %v3348, %v3367
        %3369 = vdwg.mxu0
        %3370 = vst [vmem:[%s256] sm:$0xf] %v3368
        %s3371 = sand.u32 %s121, 1
        %s3372 = scalar_lea.sflag [#allocation5], %s3371
        %s3373 = sand.u32 %s121, 1
        %s3374 = smul.addr %s3373, 4
        %s3375 = scalar_lea.vmem [#allocation8], %s3374
        // Predicated region
        $region49: #{network_forward.1} parent=35 // pred_check
          %p3376 = pneg %p131
        $region50: #{network_forward.1} parent=35 // pred_check_branch
          %3378 = sbr.rel (%p3376) target = $region52
        $region51: #{network_forward.1} parent=35 // pred_region
          %3380 = vsyncadd %s3372, 0
          %s3381 = smul.addr %s24, 4
          %s3382 = scalar_lea.hbm %s4, %s3381
          %s3384 = sshll.u32 %s3375, 4
          %s3385 = int_to_ptr.vmem [resolvable:$true] %s3384
          %s3386 = sshll.u32 %s3382, 4
          %s3387 = int_to_ptr.hbm [resolvable:$true] %s3386
          %3389 = dma.vmem_to_hbm [thread:$0]  %s3385, 64, %s3387, %s3372
        $region52: #{network_forward.1} parent=35 // pred_fallthru
          _
        // Predicated region
        $region53: #{network_forward.1} parent=35 // pred_check
          %p3390 = pneg %p152
        $region54: #{network_forward.1} parent=35 // pred_check_branch
          %3392 = sbr.rel (%p3390) target = $region56
        $region55: #{network_forward.1} parent=35 // pred_region
          _
        $region56: #{network_forward.1} parent=35 // pred_fallthru
          _
        // Predicated region
        $region57: #{network_forward.1} parent=35 // pred_check
          %p3393 = pneg %p152
        $region58: #{network_forward.1} parent=35 // pred_check_branch
          %3395 = sbr.rel (%p3393) target = $region60
        $region59: #{network_forward.1} parent=35 // pred_region
          _
        $region60: #{network_forward.1} parent=35 // pred_fallthru
          _
      $region36: #{network_forward.1} parent=5 // pred_fallthru
        _
      %p3396 = scmp.le.s32.totalorder 2, %s19
      // Predicated region
      $region61: #{network_forward.1} parent=5 // pred_check
        %p3397 = pneg %p3396
      $region62: #{network_forward.1} parent=5 // pred_check_branch
        %3399 = sbr.rel (%p3397) target = $region64
      $region63: #{network_forward.1} parent=5 // pred_region
        %s3400 = ssub.s32 %s19, 2
        // Predicated region
        $region65: #{network_forward.1} parent=63 // pred_check
          %p3401 = pneg %p137
        $region66: #{network_forward.1} parent=63 // pred_check_branch
          %3403 = sbr.rel (%p3401) target = $region68
        $region67: #{network_forward.1} parent=63 // pred_region
          %s3404 = sand.u32 %s122, 1
          %s3405 = scalar_lea.sflag [#allocation5], %s3404
          %s3406 = sand.u32 %s122, 1
          %s3407 = smul.addr %s3406, 4
          %s3408 = scalar_lea.vmem [#allocation8], %s3407
          %3410 = dma.done %s3405, 64
        $region68: #{network_forward.1} parent=63 // pred_fallthru
          _
      $region64: #{network_forward.1} parent=5 // pred_fallthru
        _
    $region6: #{network_forward.1} parent=1 // loop_footer
      %s23 = sadd.s32 1, %s19
    $region7: #{network_forward.1} parent=1 // loop_footer_branch
      %18 = sbr.rel target = $region3
    $region8: #{network_forward.1} parent=1 // loop_exit
      _
    %3411 = vsyncpa [#allocation4], 1
    %s3412 = scalar_lea.sflag [#allocation4], 1
    %3413 = vsyncpa %s3412, 1
    %3414 = vsyncpa [#allocation7], 1
    %s3415 = scalar_lea.sflag [#allocation7], 1
    %3416 = vsyncpa %s3415, 1
    %3417 = vsyncpa [#allocation5], 1
    %s3418 = scalar_lea.sflag [#allocation5], 1
    %3419 = vsyncpa %s3418, 1

</llo_original>
